<compile_context>
chip_gen: v7x
topology: tpu7x:2x2x1
jax: 0.10.0
libtpu: 0.0.40
codegen_flags: <defaults>
</compile_context>

<pallas_src>
import jax
import jax.numpy as jnp
from jax import lax
from jax.experimental import pallas as pl
from jax.experimental.pallas import tpu as pltpu

HIDDEN_DIM = 100
INPUT_DIM = 28
LAYER_DIM = 1          # single layer implemented (layer_dim == 1 in the module usage)
OUTPUT_DIM = 10


def _round_up(x, m):
    return ((x + m - 1) // m) * m


def lstm_kernel(x_ref, wih_ref, whh_ref, b_ref, wfc_ref, bfc_ref, out_ref, xp_ref):
    # xp_ref scratch: (T, Bp, 4*Hp) — hoisted input projection for all timesteps.
    Tn, Bp, G4 = xp_ref.shape
    Hp = G4 // 4

    # Hoisted, fused input projection: one (T*Bp, D) @ (D, 4Hp) matmul + bias.
    xp = jnp.dot(x_ref[...], wih_ref[...], preferred_element_type=jnp.float32) + b_ref[...]
    xp_ref[...] = xp.reshape(Tn, Bp, G4)

    h0 = jnp.zeros((Bp, Hp), jnp.float32)
    c0 = jnp.zeros((Bp, Hp), jnp.float32)

    def step(t, carry):
        h, c = carry
        # Serial recurrence path: single fused (Bp, Hp) @ (Hp, 4Hp) matmul.
        gates = xp_ref[t] + jnp.dot(h, whh_ref[...], preferred_element_type=jnp.float32)
        i_g = jax.nn.sigmoid(gates[:, 0 * Hp:1 * Hp])
        f_g = jax.nn.sigmoid(gates[:, 1 * Hp:2 * Hp])
        g_g = jnp.tanh(gates[:, 2 * Hp:3 * Hp])
        o_g = jax.nn.sigmoid(gates[:, 3 * Hp:4 * Hp])
        c_new = f_g * c + i_g * g_g
        h_new = o_g * jnp.tanh(c_new)
        return h_new, c_new

    h_T, _ = lax.fori_loop(0, Tn, step, (h0, c0), unroll=True)

    # Lane-dense (Bp, 128) output; padded lanes carry zeros and are sliced off outside.
    out_ref[...] = (jnp.dot(h_T, wfc_ref[...], preferred_element_type=jnp.float32)
                    + bfc_ref[...]).astype(out_ref.dtype)


def lstm_forward(x_btd, w_ih, w_hh, b_gates, w_fc, b_fc):
    """x_btd: (B, T, input_dim) float32 (PyTorch batch_first layout).
       w_ih: (4, input_dim, H), w_hh: (4, H, H), b_gates: (4, H) = b_ih + b_hh,
       w_fc: (H, output_dim), b_fc: (1, output_dim). Gate order (i, f, g, o)."""
    B, T, D = x_btd.shape
    H = w_hh.shape[-1]
    O = w_fc.shape[-1]

    Bp = max(8, _round_up(B, 8))      # sublane-aligned batch
    Hp = _round_up(H, 128)            # lane-aligned hidden
    G4 = 4 * Hp
    Op = _round_up(O, 128)            # lane-dense output

    # ---- pad / fuse parameters (zero-padded lanes stay inert through the recurrence) ----
    wih_f = jnp.zeros((D, G4), jnp.float32)
    whh_f = jnp.zeros((Hp, G4), jnp.float32)
    b_f = jnp.zeros((1, G4), jnp.float32)
    for g in range(4):
        wih_f = wih_f.at[:, g * Hp:g * Hp + H].set(w_ih[g])
        whh_f = whh_f.at[:H, g * Hp:g * Hp + H].set(w_hh[g])
        b_f = b_f.at[0, g * Hp:g * Hp + H].set(b_gates[g])
    wfc_p = jnp.zeros((Hp, Op), jnp.float32).at[:H, :O].set(w_fc)
    bfc_p = jnp.zeros((1, Op), jnp.float32).at[0, :O].set(b_fc[0])

    # ---- pad batch, go time-major, flatten to a single (T*Bp, D) slab ----
    x_pad = jnp.zeros((Bp, T, D), jnp.float32).at[:B].set(x_btd)
    x_flat = jnp.transpose(x_pad, (1, 0, 2)).reshape(T * Bp, D)

    grid_spec = pltpu.PrefetchScalarGridSpec(
        num_scalar_prefetch=0,
        grid=(1,),                                            # whole recurrence in one step
        in_specs=[
            pl.BlockSpec((T * Bp, D), lambda i: (0, 0)),      # x slab (fully resident)
            pl.BlockSpec((D, G4), lambda i: (0, 0)),          # fused W_ih
            pl.BlockSpec((Hp, G4), lambda i: (0, 0)),         # fused W_hh
            pl.BlockSpec((1, G4), lambda i: (0, 0)),          # fused gate bias
            pl.BlockSpec((Hp, Op), lambda i: (0, 0)),         # fc weight (padded)
            pl.BlockSpec((1, Op), lambda i: (0, 0)),          # fc bias (padded)
        ],
        out_specs=pl.BlockSpec((Bp, Op), lambda i: (0, 0)),
        scratch_shapes=[
            pltpu.VMEM((T, Bp, G4), jnp.float32),             # hoisted x-projection
        ],
    )

    out_full = pl.pallas_call(
        lstm_kernel,
        out_shape=jax.ShapeDtypeStruct((Bp, Op), jnp.float32),
        grid_spec=grid_spec,
        compiler_params=pltpu.CompilerParams(
            dimension_semantics=("arbitrary",)),
    )(x_flat, wih_f, whh_f, b_f, wfc_p, bfc_p)

    return out_full[:B, :O]


def reference_forward(x_btd, w_ih, w_hh, b_gates, w_fc, b_fc):
    """Pure-JAX reference (lax.scan) for correctness checking."""
    B, T, D = x_btd.shape
    H = w_hh.shape[-1]
    x_tbd = jnp.transpose(x_btd, (1, 0, 2))

    def step(carry, x_t):
        h, c = carry
        gates = [x_t @ w_ih[g] + h @ w_hh[g] + b_gates[g] for g in range(4)]
        i = jax.nn.sigmoid(gates[0])
        f = jax.nn.sigmoid(gates[1])
        g = jnp.tanh(gates[2])
        o = jax.nn.sigmoid(gates[3])
        c_new = f * c + i * g
        h_new = o * jnp.tanh(c_new)
        return (h_new, c_new), None

    h0 = jnp.zeros((B, H), jnp.float32)
    c0 = jnp.zeros((B, H), jnp.float32)
    (h_T, _), _ = lax.scan(step, (h0, c0), x_tbd)
    return h_T @ w_fc + b_fc


if __name__ == "__main__":
    B, T = 4, 8
    key = jax.random.PRNGKey(0)
    kx, k1, k2, k3, k4, k5, k6 = jax.random.split(key, 7)

    bound = 1.0 / jnp.sqrt(HIDDEN_DIM)
    x = jax.random.normal(kx, (B, T, INPUT_DIM), dtype=jnp.float32)

    # Parameters (deterministic init). Stored pre-transposed: (4, in, H), gate order i,f,g,o.
    w_ih = jax.random.uniform(k1, (4, INPUT_DIM, HIDDEN_DIM), jnp.float32, -bound, bound)
    w_hh = jax.random.uniform(k2, (4, HIDDEN_DIM, HIDDEN_DIM), jnp.float32, -bound, bound)
    b_ih = jax.random.uniform(k3, (4, HIDDEN_DIM), jnp.float32, -bound, bound)
    b_hh = jax.random.uniform(k4, (4, HIDDEN_DIM), jnp.float32, -bound, bound)
    b_gates = b_ih + b_hh  # torch adds both biases
    w_fc = jax.random.uniform(k5, (HIDDEN_DIM, OUTPUT_DIM), jnp.float32, -bound, bound)
    b_fc = jax.random.uniform(k6, (1, OUTPUT_DIM), jnp.float32, -bound, bound)

    out = lstm_forward(x, w_ih, w_hh, b_gates, w_fc, b_fc)
    out = jax.block_until_ready(out)

    ref = reference_forward(x, w_ih, w_hh, b_gates, w_fc, b_fc)
    assert out.shape == (B, OUTPUT_DIM)
    assert jnp.allclose(out, ref, atol=1e-4, rtol=1e-4), "mismatch vs JAX reference"

    print("KERNEL_OK")
</pallas_src>

<mosaic_0001>
module attributes {stable_mosaic.version = 11 : i64} {
  func.func @lstm_kernel(%arg0: i32, %arg1: memref<64x28xf32, #tpu.memory_space<vmem>>, %arg2: memref<28x512xf32, #tpu.memory_space<vmem>>, %arg3: memref<128x512xf32, #tpu.memory_space<vmem>>, %arg4: memref<1x512xf32, #tpu.memory_space<vmem>>, %arg5: memref<128x128xf32, #tpu.memory_space<vmem>>, %arg6: memref<1x128xf32, #tpu.memory_space<vmem>>, %arg7: memref<8x128xf32, #tpu.memory_space<vmem>>, %arg8: memref<8x8x512xf32, #tpu.memory_space<vmem>>) attributes {dimension_semantics = [#tpu.dimension_semantics<arbitrary>], iteration_bounds = array<i64: 1>, scalar_prefetch = 0 : i64, scratch_operands = 1 : i64, tpu.core_type = #tpu.core_type<tc>, window_params = [{pipeline_mode = #tpu.pipeline_mode<synchronous>, transform_indices = @transform_0, window_bounds = array<i64: 64, 28>}, {pipeline_mode = #tpu.pipeline_mode<synchronous>, transform_indices = @transform_1, window_bounds = array<i64: 28, 512>}, {pipeline_mode = #tpu.pipeline_mode<synchronous>, transform_indices = @transform_2, window_bounds = array<i64: 128, 512>}, {pipeline_mode = #tpu.pipeline_mode<synchronous>, transform_indices = @transform_3, window_bounds = array<i64: 1, 512>}, {pipeline_mode = #tpu.pipeline_mode<synchronous>, transform_indices = @transform_4, window_bounds = array<i64: 128, 128>}, {pipeline_mode = #tpu.pipeline_mode<synchronous>, transform_indices = @transform_5, window_bounds = array<i64: 1, 128>}, {pipeline_mode = #tpu.pipeline_mode<synchronous>, transform_indices = @transform_6, window_bounds = array<i64: 8, 128>}]} {
    %c0 = arith.constant 0 : index
    %c0_0 = arith.constant 0 : index
    %0 = vector.load %arg1[%c0, %c0_0] : memref<64x28xf32, #tpu.memory_space<vmem>>, vector<64x28xf32>
    %c0_1 = arith.constant 0 : index
    %c0_2 = arith.constant 0 : index
    %1 = vector.load %arg2[%c0_1, %c0_2] : memref<28x512xf32, #tpu.memory_space<vmem>>, vector<28x512xf32>
    %cst = arith.constant dense<0.000000e+00> : vector<64x512xf32>
    %2 = tpu.matmul %0, %1, %cst {dimension_numbers = #tpu.dot_dimension_numbers<[1], [0], [0], [1], [0, 0, 1, 1], [], []>} : vector<64x28xf32>, vector<28x512xf32>, vector<64x512xf32> -> vector<64x512xf32>
    %c0_3 = arith.constant 0 : index
    %c0_4 = arith.constant 0 : index
    %3 = vector.load %arg4[%c0_3, %c0_4] : memref<1x512xf32, #tpu.memory_space<vmem>>, vector<1x512xf32>
    %4 = vector.broadcast %3 : vector<1x512xf32> to vector<64x512xf32>
    %5 = arith.addf %2, %4 : vector<64x512xf32>
    %6 = vector.shape_cast %5 : vector<64x512xf32> to vector<8x8x512xf32>
    %c0_5 = arith.constant 0 : index
    %c0_6 = arith.constant 0 : index
    %c0_7 = arith.constant 0 : index
    %7 = vector.load %arg8[%c0_5, %c0_6, %c0_7] : memref<8x8x512xf32, #tpu.memory_space<vmem>>, vector<8x8x512xf32>
    tpu.vector_store %arg8[%c0_5, %c0_6, %c0_7], %6 {strides = array<i32>} : memref<8x8x512xf32, #tpu.memory_space<vmem>>, vector<8x8x512xf32>,
    %cst_8 = arith.constant 0.000000e+00 : f32
    %8 = vector.broadcast %cst_8 : f32 to vector<8x128xf32>
    %cst_9 = arith.constant 0.000000e+00 : f32
    %9 = vector.broadcast %cst_9 : f32 to vector<8x128xf32>
    %c0_i32 = arith.constant 0 : i32
    %10 = arith.index_cast %c0_i32 : i32 to index
    %c0_10 = arith.constant 0 : index
    %c0_11 = arith.constant 0 : index
    %11 = vector.load %arg8[%10, %c0_10, %c0_11] : memref<8x8x512xf32, #tpu.memory_space<vmem>>, vector<1x8x512xf32>
    %12 = vector.shape_cast %11 : vector<1x8x512xf32> to vector<8x512xf32>
    %c0_12 = arith.constant 0 : index
    %c0_13 = arith.constant 0 : index
    %13 = vector.load %arg3[%c0_12, %c0_13] : memref<128x512xf32, #tpu.memory_space<vmem>>, vector<128x512xf32>
    %cst_14 = arith.constant dense<0.000000e+00> : vector<8x512xf32>
    %14 = tpu.matmul %8, %13, %cst_14 {dimension_numbers = #tpu.dot_dimension_numbers<[1], [0], [0], [1], [0, 0, 1, 1], [], []>} : vector<8x128xf32>, vector<128x512xf32>, vector<8x512xf32> -> vector<8x512xf32>
    %15 = arith.addf %12, %14 : vector<8x512xf32>
    %16 = vector.extract_strided_slice %15 {offsets = [0, 0], sizes = [8, 128], strides = [1, 1]} : vector<8x512xf32> to vector<8x128xf32>
    %17 = arith.negf %16 : vector<8x128xf32>
    %18 = math.exp %17 : vector<8x128xf32>
    %cst_15 = arith.constant 1.000000e+00 : f32
    %19 = vector.broadcast %cst_15 : f32 to vector<8x128xf32>
    %20 = arith.addf %19, %18 : vector<8x128xf32>
    %21 = arith.divf %19, %20 : vector<8x128xf32>
    %22 = vector.extract_strided_slice %15 {offsets = [0, 128], sizes = [8, 128], strides = [1, 1]} : vector<8x512xf32> to vector<8x128xf32>
    %23 = arith.negf %22 : vector<8x128xf32>
    %24 = math.exp %23 : vector<8x128xf32>
    %cst_16 = arith.constant 1.000000e+00 : f32
    %25 = vector.broadcast %cst_16 : f32 to vector<8x128xf32>
    %26 = arith.addf %25, %24 : vector<8x128xf32>
    %27 = arith.divf %25, %26 : vector<8x128xf32>
    %28 = vector.extract_strided_slice %15 {offsets = [0, 256], sizes = [8, 128], strides = [1, 1]} : vector<8x512xf32> to vector<8x128xf32>
    %29 = math.tanh %28 : vector<8x128xf32>
    %30 = vector.extract_strided_slice %15 {offsets = [0, 384], sizes = [8, 128], strides = [1, 1]} : vector<8x512xf32> to vector<8x128xf32>
    %31 = arith.negf %30 : vector<8x128xf32>
    %32 = math.exp %31 : vector<8x128xf32>
    %cst_17 = arith.constant 1.000000e+00 : f32
    %33 = vector.broadcast %cst_17 : f32 to vector<8x128xf32>
    %34 = arith.addf %33, %32 : vector<8x128xf32>
    %35 = arith.divf %33, %34 : vector<8x128xf32>
    %36 = arith.mulf %27, %9 : vector<8x128xf32>
    %37 = arith.mulf %21, %29 : vector<8x128xf32>
    %38 = arith.addf %36, %37 : vector<8x128xf32>
    %39 = math.tanh %38 : vector<8x128xf32>
    %40 = arith.mulf %35, %39 : vector<8x128xf32>
    %c1_i32 = arith.constant 1 : i32
    %41 = arith.index_cast %c1_i32 : i32 to index
    %c0_18 = arith.constant 0 : index
    %c0_19 = arith.constant 0 : index
    %42 = vector.load %arg8[%41, %c0_18, %c0_19] : memref<8x8x512xf32, #tpu.memory_space<vmem>>, vector<1x8x512xf32>
    %43 = vector.shape_cast %42 : vector<1x8x512xf32> to vector<8x512xf32>
    %c0_20 = arith.constant 0 : index
    %c0_21 = arith.constant 0 : index
    %44 = vector.load %arg3[%c0_20, %c0_21] : memref<128x512xf32, #tpu.memory_space<vmem>>, vector<128x512xf32>
    %cst_22 = arith.constant dense<0.000000e+00> : vector<8x512xf32>
    %45 = tpu.matmul %40, %44, %cst_22 {dimension_numbers = #tpu.dot_dimension_numbers<[1], [0], [0], [1], [0, 0, 1, 1], [], []>} : vector<8x128xf32>, vector<128x512xf32>, vector<8x512xf32> -> vector<8x512xf32>
    %46 = arith.addf %43, %45 : vector<8x512xf32>
    %47 = vector.extract_strided_slice %46 {offsets = [0, 0], sizes = [8, 128], strides = [1, 1]} : vector<8x512xf32> to vector<8x128xf32>
    %48 = arith.negf %47 : vector<8x128xf32>
    %49 = math.exp %48 : vector<8x128xf32>
    %cst_23 = arith.constant 1.000000e+00 : f32
    %50 = vector.broadcast %cst_23 : f32 to vector<8x128xf32>
    %51 = arith.addf %50, %49 : vector<8x128xf32>
    %52 = arith.divf %50, %51 : vector<8x128xf32>
    %53 = vector.extract_strided_slice %46 {offsets = [0, 128], sizes = [8, 128], strides = [1, 1]} : vector<8x512xf32> to vector<8x128xf32>
    %54 = arith.negf %53 : vector<8x128xf32>
    %55 = math.exp %54 : vector<8x128xf32>
    %cst_24 = arith.constant 1.000000e+00 : f32
    %56 = vector.broadcast %cst_24 : f32 to vector<8x128xf32>
    %57 = arith.addf %56, %55 : vector<8x128xf32>
    %58 = arith.divf %56, %57 : vector<8x128xf32>
    %59 = vector.extract_strided_slice %46 {offsets = [0, 256], sizes = [8, 128], strides = [1, 1]} : vector<8x512xf32> to vector<8x128xf32>
    %60 = math.tanh %59 : vector<8x128xf32>
    %61 = vector.extract_strided_slice %46 {offsets = [0, 384], sizes = [8, 128], strides = [1, 1]} : vector<8x512xf32> to vector<8x128xf32>
    %62 = arith.negf %61 : vector<8x128xf32>
    %63 = math.exp %62 : vector<8x128xf32>
    %cst_25 = arith.constant 1.000000e+00 : f32
    %64 = vector.broadcast %cst_25 : f32 to vector<8x128xf32>
    %65 = arith.addf %64, %63 : vector<8x128xf32>
    %66 = arith.divf %64, %65 : vector<8x128xf32>
    %67 = arith.mulf %58, %38 : vector<8x128xf32>
    %68 = arith.mulf %52, %60 : vector<8x128xf32>
    %69 = arith.addf %67, %68 : vector<8x128xf32>
    %70 = math.tanh %69 : vector<8x128xf32>
    %71 = arith.mulf %66, %70 : vector<8x128xf32>
    %c2_i32 = arith.constant 2 : i32
    %72 = arith.index_cast %c2_i32 : i32 to index
    %c0_26 = arith.constant 0 : index
    %c0_27 = arith.constant 0 : index
    %73 = vector.load %arg8[%72, %c0_26, %c0_27] : memref<8x8x512xf32, #tpu.memory_space<vmem>>, vector<1x8x512xf32>
    %74 = vector.shape_cast %73 : vector<1x8x512xf32> to vector<8x512xf32>
    %c0_28 = arith.constant 0 : index
    %c0_29 = arith.constant 0 : index
    %75 = vector.load %arg3[%c0_28, %c0_29] : memref<128x512xf32, #tpu.memory_space<vmem>>, vector<128x512xf32>
    %cst_30 = arith.constant dense<0.000000e+00> : vector<8x512xf32>
    %76 = tpu.matmul %71, %75, %cst_30 {dimension_numbers = #tpu.dot_dimension_numbers<[1], [0], [0], [1], [0, 0, 1, 1], [], []>} : vector<8x128xf32>, vector<128x512xf32>, vector<8x512xf32> -> vector<8x512xf32>
    %77 = arith.addf %74, %76 : vector<8x512xf32>
    %78 = vector.extract_strided_slice %77 {offsets = [0, 0], sizes = [8, 128], strides = [1, 1]} : vector<8x512xf32> to vector<8x128xf32>
    %79 = arith.negf %78 : vector<8x128xf32>
    %80 = math.exp %79 : vector<8x128xf32>
    %cst_31 = arith.constant 1.000000e+00 : f32
    %81 = vector.broadcast %cst_31 : f32 to vector<8x128xf32>
    %82 = arith.addf %81, %80 : vector<8x128xf32>
    %83 = arith.divf %81, %82 : vector<8x128xf32>
    %84 = vector.extract_strided_slice %77 {offsets = [0, 128], sizes = [8, 128], strides = [1, 1]} : vector<8x512xf32> to vector<8x128xf32>
    %85 = arith.negf %84 : vector<8x128xf32>
    %86 = math.exp %85 : vector<8x128xf32>
    %cst_32 = arith.constant 1.000000e+00 : f32
    %87 = vector.broadcast %cst_32 : f32 to vector<8x128xf32>
    %88 = arith.addf %87, %86 : vector<8x128xf32>
    %89 = arith.divf %87, %88 : vector<8x128xf32>
    %90 = vector.extract_strided_slice %77 {offsets = [0, 256], sizes = [8, 128], strides = [1, 1]} : vector<8x512xf32> to vector<8x128xf32>
    %91 = math.tanh %90 : vector<8x128xf32>
    %92 = vector.extract_strided_slice %77 {offsets = [0, 384], sizes = [8, 128], strides = [1, 1]} : vector<8x512xf32> to vector<8x128xf32>
    %93 = arith.negf %92 : vector<8x128xf32>
    %94 = math.exp %93 : vector<8x128xf32>
    %cst_33 = arith.constant 1.000000e+00 : f32
    %95 = vector.broadcast %cst_33 : f32 to vector<8x128xf32>
    %96 = arith.addf %95, %94 : vector<8x128xf32>
    %97 = arith.divf %95, %96 : vector<8x128xf32>
    %98 = arith.mulf %89, %69 : vector<8x128xf32>
    %99 = arith.mulf %83, %91 : vector<8x128xf32>
    %100 = arith.addf %98, %99 : vector<8x128xf32>
    %101 = math.tanh %100 : vector<8x128xf32>
    %102 = arith.mulf %97, %101 : vector<8x128xf32>
    %c3_i32 = arith.constant 3 : i32
    %103 = arith.index_cast %c3_i32 : i32 to index
    %c0_34 = arith.constant 0 : index
    %c0_35 = arith.constant 0 : index
    %104 = vector.load %arg8[%103, %c0_34, %c0_35] : memref<8x8x512xf32, #tpu.memory_space<vmem>>, vector<1x8x512xf32>
    %105 = vector.shape_cast %104 : vector<1x8x512xf32> to vector<8x512xf32>
    %c0_36 = arith.constant 0 : index
    %c0_37 = arith.constant 0 : index
    %106 = vector.load %arg3[%c0_36, %c0_37] : memref<128x512xf32, #tpu.memory_space<vmem>>, vector<128x512xf32>
    %cst_38 = arith.constant dense<0.000000e+00> : vector<8x512xf32>
    %107 = tpu.matmul %102, %106, %cst_38 {dimension_numbers = #tpu.dot_dimension_numbers<[1], [0], [0], [1], [0, 0, 1, 1], [], []>} : vector<8x128xf32>, vector<128x512xf32>, vector<8x512xf32> -> vector<8x512xf32>
    %108 = arith.addf %105, %107 : vector<8x512xf32>
    %109 = vector.extract_strided_slice %108 {offsets = [0, 0], sizes = [8, 128], strides = [1, 1]} : vector<8x512xf32> to vector<8x128xf32>
    %110 = arith.negf %109 : vector<8x128xf32>
    %111 = math.exp %110 : vector<8x128xf32>
    %cst_39 = arith.constant 1.000000e+00 : f32
    %112 = vector.broadcast %cst_39 : f32 to vector<8x128xf32>
    %113 = arith.addf %112, %111 : vector<8x128xf32>
    %114 = arith.divf %112, %113 : vector<8x128xf32>
    %115 = vector.extract_strided_slice %108 {offsets = [0, 128], sizes = [8, 128], strides = [1, 1]} : vector<8x512xf32> to vector<8x128xf32>
    %116 = arith.negf %115 : vector<8x128xf32>
    %117 = math.exp %116 : vector<8x128xf32>
    %cst_40 = arith.constant 1.000000e+00 : f32
    %118 = vector.broadcast %cst_40 : f32 to vector<8x128xf32>
    %119 = arith.addf %118, %117 : vector<8x128xf32>
    %120 = arith.divf %118, %119 : vector<8x128xf32>
    %121 = vector.extract_strided_slice %108 {offsets = [0, 256], sizes = [8, 128], strides = [1, 1]} : vector<8x512xf32> to vector<8x128xf32>
    %122 = math.tanh %121 : vector<8x128xf32>
    %123 = vector.extract_strided_slice %108 {offsets = [0, 384], sizes = [8, 128], strides = [1, 1]} : vector<8x512xf32> to vector<8x128xf32>
    %124 = arith.negf %123 : vector<8x128xf32>
    %125 = math.exp %124 : vector<8x128xf32>
    %cst_41 = arith.constant 1.000000e+00 : f32
    %126 = vector.broadcast %cst_41 : f32 to vector<8x128xf32>
    %127 = arith.addf %126, %125 : vector<8x128xf32>
    %128 = arith.divf %126, %127 : vector<8x128xf32>
    %129 = arith.mulf %120, %100 : vector<8x128xf32>
    %130 = arith.mulf %114, %122 : vector<8x128xf32>
    %131 = arith.addf %129, %130 : vector<8x128xf32>
    %132 = math.tanh %131 : vector<8x128xf32>
    %133 = arith.mulf %128, %132 : vector<8x128xf32>
    %c4_i32 = arith.constant 4 : i32
    %134 = arith.index_cast %c4_i32 : i32 to index
    %c0_42 = arith.constant 0 : index
    %c0_43 = arith.constant 0 : index
    %135 = vector.load %arg8[%134, %c0_42, %c0_43] : memref<8x8x512xf32, #tpu.memory_space<vmem>>, vector<1x8x512xf32>
    %136 = vector.shape_cast %135 : vector<1x8x512xf32> to vector<8x512xf32>
    %c0_44 = arith.constant 0 : index
    %c0_45 = arith.constant 0 : index
    %137 = vector.load %arg3[%c0_44, %c0_45] : memref<128x512xf32, #tpu.memory_space<vmem>>, vector<128x512xf32>
    %cst_46 = arith.constant dense<0.000000e+00> : vector<8x512xf32>
    %138 = tpu.matmul %133, %137, %cst_46 {dimension_numbers = #tpu.dot_dimension_numbers<[1], [0], [0], [1], [0, 0, 1, 1], [], []>} : vector<8x128xf32>, vector<128x512xf32>, vector<8x512xf32> -> vector<8x512xf32>
    %139 = arith.addf %136, %138 : vector<8x512xf32>
    %140 = vector.extract_strided_slice %139 {offsets = [0, 0], sizes = [8, 128], strides = [1, 1]} : vector<8x512xf32> to vector<8x128xf32>
    %141 = arith.negf %140 : vector<8x128xf32>
    %142 = math.exp %141 : vector<8x128xf32>
    %cst_47 = arith.constant 1.000000e+00 : f32
    %143 = vector.broadcast %cst_47 : f32 to vector<8x128xf32>
    %144 = arith.addf %143, %142 : vector<8x128xf32>
    %145 = arith.divf %143, %144 : vector<8x128xf32>
    %146 = vector.extract_strided_slice %139 {offsets = [0, 128], sizes = [8, 128], strides = [1, 1]} : vector<8x512xf32> to vector<8x128xf32>
    %147 = arith.negf %146 : vector<8x128xf32>
    %148 = math.exp %147 : vector<8x128xf32>
    %cst_48 = arith.constant 1.000000e+00 : f32
    %149 = vector.broadcast %cst_48 : f32 to vector<8x128xf32>
    %150 = arith.addf %149, %148 : vector<8x128xf32>
    %151 = arith.divf %149, %150 : vector<8x128xf32>
    %152 = vector.extract_strided_slice %139 {offsets = [0, 256], sizes = [8, 128], strides = [1, 1]} : vector<8x512xf32> to vector<8x128xf32>
    %153 = math.tanh %152 : vector<8x128xf32>
    %154 = vector.extract_strided_slice %139 {offsets = [0, 384], sizes = [8, 128], strides = [1, 1]} : vector<8x512xf32> to vector<8x128xf32>
    %155 = arith.negf %154 : vector<8x128xf32>
    %156 = math.exp %155 : vector<8x128xf32>
    %cst_49 = arith.constant 1.000000e+00 : f32
    %157 = vector.broadcast %cst_49 : f32 to vector<8x128xf32>
    %158 = arith.addf %157, %156 : vector<8x128xf32>
    %159 = arith.divf %157, %158 : vector<8x128xf32>
    %160 = arith.mulf %151, %131 : vector<8x128xf32>
    %161 = arith.mulf %145, %153 : vector<8x128xf32>
    %162 = arith.addf %160, %161 : vector<8x128xf32>
    %163 = math.tanh %162 : vector<8x128xf32>
    %164 = arith.mulf %159, %163 : vector<8x128xf32>
    %c5_i32 = arith.constant 5 : i32
    %165 = arith.index_cast %c5_i32 : i32 to index
    %c0_50 = arith.constant 0 : index
    %c0_51 = arith.constant 0 : index
    %166 = vector.load %arg8[%165, %c0_50, %c0_51] : memref<8x8x512xf32, #tpu.memory_space<vmem>>, vector<1x8x512xf32>
    %167 = vector.shape_cast %166 : vector<1x8x512xf32> to vector<8x512xf32>
    %c0_52 = arith.constant 0 : index
    %c0_53 = arith.constant 0 : index
    %168 = vector.load %arg3[%c0_52, %c0_53] : memref<128x512xf32, #tpu.memory_space<vmem>>, vector<128x512xf32>
    %cst_54 = arith.constant dense<0.000000e+00> : vector<8x512xf32>
    %169 = tpu.matmul %164, %168, %cst_54 {dimension_numbers = #tpu.dot_dimension_numbers<[1], [0], [0], [1], [0, 0, 1, 1], [], []>} : vector<8x128xf32>, vector<128x512xf32>, vector<8x512xf32> -> vector<8x512xf32>
    %170 = arith.addf %167, %169 : vector<8x512xf32>
    %171 = vector.extract_strided_slice %170 {offsets = [0, 0], sizes = [8, 128], strides = [1, 1]} : vector<8x512xf32> to vector<8x128xf32>
    %172 = arith.negf %171 : vector<8x128xf32>
    %173 = math.exp %172 : vector<8x128xf32>
    %cst_55 = arith.constant 1.000000e+00 : f32
    %174 = vector.broadcast %cst_55 : f32 to vector<8x128xf32>
    %175 = arith.addf %174, %173 : vector<8x128xf32>
    %176 = arith.divf %174, %175 : vector<8x128xf32>
    %177 = vector.extract_strided_slice %170 {offsets = [0, 128], sizes = [8, 128], strides = [1, 1]} : vector<8x512xf32> to vector<8x128xf32>
    %178 = arith.negf %177 : vector<8x128xf32>
    %179 = math.exp %178 : vector<8x128xf32>
    %cst_56 = arith.constant 1.000000e+00 : f32
    %180 = vector.broadcast %cst_56 : f32 to vector<8x128xf32>
    %181 = arith.addf %180, %179 : vector<8x128xf32>
    %182 = arith.divf %180, %181 : vector<8x128xf32>
    %183 = vector.extract_strided_slice %170 {offsets = [0, 256], sizes = [8, 128], strides = [1, 1]} : vector<8x512xf32> to vector<8x128xf32>
    %184 = math.tanh %183 : vector<8x128xf32>
    %185 = vector.extract_strided_slice %170 {offsets = [0, 384], sizes = [8, 128], strides = [1, 1]} : vector<8x512xf32> to vector<8x128xf32>
    %186 = arith.negf %185 : vector<8x128xf32>
    %187 = math.exp %186 : vector<8x128xf32>
    %cst_57 = arith.constant 1.000000e+00 : f32
    %188 = vector.broadcast %cst_57 : f32 to vector<8x128xf32>
    %189 = arith.addf %188, %187 : vector<8x128xf32>
    %190 = arith.divf %188, %189 : vector<8x128xf32>
    %191 = arith.mulf %182, %162 : vector<8x128xf32>
    %192 = arith.mulf %176, %184 : vector<8x128xf32>
    %193 = arith.addf %191, %192 : vector<8x128xf32>
    %194 = math.tanh %193 : vector<8x128xf32>
    %195 = arith.mulf %190, %194 : vector<8x128xf32>
    %c6_i32 = arith.constant 6 : i32
    %196 = arith.index_cast %c6_i32 : i32 to index
    %c0_58 = arith.constant 0 : index
    %c0_59 = arith.constant 0 : index
    %197 = vector.load %arg8[%196, %c0_58, %c0_59] : memref<8x8x512xf32, #tpu.memory_space<vmem>>, vector<1x8x512xf32>
    %198 = vector.shape_cast %197 : vector<1x8x512xf32> to vector<8x512xf32>
    %c0_60 = arith.constant 0 : index
    %c0_61 = arith.constant 0 : index
    %199 = vector.load %arg3[%c0_60, %c0_61] : memref<128x512xf32, #tpu.memory_space<vmem>>, vector<128x512xf32>
    %cst_62 = arith.constant dense<0.000000e+00> : vector<8x512xf32>
    %200 = tpu.matmul %195, %199, %cst_62 {dimension_numbers = #tpu.dot_dimension_numbers<[1], [0], [0], [1], [0, 0, 1, 1], [], []>} : vector<8x128xf32>, vector<128x512xf32>, vector<8x512xf32> -> vector<8x512xf32>
    %201 = arith.addf %198, %200 : vector<8x512xf32>
    %202 = vector.extract_strided_slice %201 {offsets = [0, 0], sizes = [8, 128], strides = [1, 1]} : vector<8x512xf32> to vector<8x128xf32>
    %203 = arith.negf %202 : vector<8x128xf32>
    %204 = math.exp %203 : vector<8x128xf32>
    %cst_63 = arith.constant 1.000000e+00 : f32
    %205 = vector.broadcast %cst_63 : f32 to vector<8x128xf32>
    %206 = arith.addf %205, %204 : vector<8x128xf32>
    %207 = arith.divf %205, %206 : vector<8x128xf32>
    %208 = vector.extract_strided_slice %201 {offsets = [0, 128], sizes = [8, 128], strides = [1, 1]} : vector<8x512xf32> to vector<8x128xf32>
    %209 = arith.negf %208 : vector<8x128xf32>
    %210 = math.exp %209 : vector<8x128xf32>
    %cst_64 = arith.constant 1.000000e+00 : f32
    %211 = vector.broadcast %cst_64 : f32 to vector<8x128xf32>
    %212 = arith.addf %211, %210 : vector<8x128xf32>
    %213 = arith.divf %211, %212 : vector<8x128xf32>
    %214 = vector.extract_strided_slice %201 {offsets = [0, 256], sizes = [8, 128], strides = [1, 1]} : vector<8x512xf32> to vector<8x128xf32>
    %215 = math.tanh %214 : vector<8x128xf32>
    %216 = vector.extract_strided_slice %201 {offsets = [0, 384], sizes = [8, 128], strides = [1, 1]} : vector<8x512xf32> to vector<8x128xf32>
    %217 = arith.negf %216 : vector<8x128xf32>
    %218 = math.exp %217 : vector<8x128xf32>
    %cst_65 = arith.constant 1.000000e+00 : f32
    %219 = vector.broadcast %cst_65 : f32 to vector<8x128xf32>
    %220 = arith.addf %219, %218 : vector<8x128xf32>
    %221 = arith.divf %219, %220 : vector<8x128xf32>
    %222 = arith.mulf %213, %193 : vector<8x128xf32>
    %223 = arith.mulf %207, %215 : vector<8x128xf32>
    %224 = arith.addf %222, %223 : vector<8x128xf32>
    %225 = math.tanh %224 : vector<8x128xf32>
    %226 = arith.mulf %221, %225 : vector<8x128xf32>
    %c7_i32 = arith.constant 7 : i32
    %227 = arith.index_cast %c7_i32 : i32 to index
    %c0_66 = arith.constant 0 : index
    %c0_67 = arith.constant 0 : index
    %228 = vector.load %arg8[%227, %c0_66, %c0_67] : memref<8x8x512xf32, #tpu.memory_space<vmem>>, vector<1x8x512xf32>
    %229 = vector.shape_cast %228 : vector<1x8x512xf32> to vector<8x512xf32>
    %c0_68 = arith.constant 0 : index
    %c0_69 = arith.constant 0 : index
    %230 = vector.load %arg3[%c0_68, %c0_69] : memref<128x512xf32, #tpu.memory_space<vmem>>, vector<128x512xf32>
    %cst_70 = arith.constant dense<0.000000e+00> : vector<8x512xf32>
    %231 = tpu.matmul %226, %230, %cst_70 {dimension_numbers = #tpu.dot_dimension_numbers<[1], [0], [0], [1], [0, 0, 1, 1], [], []>} : vector<8x128xf32>, vector<128x512xf32>, vector<8x512xf32> -> vector<8x512xf32>
    %232 = arith.addf %229, %231 : vector<8x512xf32>
    %233 = vector.extract_strided_slice %232 {offsets = [0, 0], sizes = [8, 128], strides = [1, 1]} : vector<8x512xf32> to vector<8x128xf32>
    %234 = arith.negf %233 : vector<8x128xf32>
    %235 = math.exp %234 : vector<8x128xf32>
    %cst_71 = arith.constant 1.000000e+00 : f32
    %236 = vector.broadcast %cst_71 : f32 to vector<8x128xf32>
    %237 = arith.addf %236, %235 : vector<8x128xf32>
    %238 = arith.divf %236, %237 : vector<8x128xf32>
    %239 = vector.extract_strided_slice %232 {offsets = [0, 128], sizes = [8, 128], strides = [1, 1]} : vector<8x512xf32> to vector<8x128xf32>
    %240 = arith.negf %239 : vector<8x128xf32>
    %241 = math.exp %240 : vector<8x128xf32>
    %cst_72 = arith.constant 1.000000e+00 : f32
    %242 = vector.broadcast %cst_72 : f32 to vector<8x128xf32>
    %243 = arith.addf %242, %241 : vector<8x128xf32>
    %244 = arith.divf %242, %243 : vector<8x128xf32>
    %245 = vector.extract_strided_slice %232 {offsets = [0, 256], sizes = [8, 128], strides = [1, 1]} : vector<8x512xf32> to vector<8x128xf32>
    %246 = math.tanh %245 : vector<8x128xf32>
    %247 = vector.extract_strided_slice %232 {offsets = [0, 384], sizes = [8, 128], strides = [1, 1]} : vector<8x512xf32> to vector<8x128xf32>
    %248 = arith.negf %247 : vector<8x128xf32>
    %249 = math.exp %248 : vector<8x128xf32>
    %cst_73 = arith.constant 1.000000e+00 : f32
    %250 = vector.broadcast %cst_73 : f32 to vector<8x128xf32>
    %251 = arith.addf %250, %249 : vector<8x128xf32>
    %252 = arith.divf %250, %251 : vector<8x128xf32>
    %253 = arith.mulf %244, %224 : vector<8x128xf32>
    %254 = arith.mulf %238, %246 : vector<8x128xf32>
    %255 = arith.addf %253, %254 : vector<8x128xf32>
    %256 = math.tanh %255 : vector<8x128xf32>
    %257 = arith.mulf %252, %256 : vector<8x128xf32>
    %c8_i32 = arith.constant 8 : i32
    %c0_74 = arith.constant 0 : index
    %c0_75 = arith.constant 0 : index
    %258 = vector.load %arg5[%c0_74, %c0_75] : memref<128x128xf32, #tpu.memory_space<vmem>>, vector<128x128xf32>
    %cst_76 = arith.constant dense<0.000000e+00> : vector<8x128xf32>
    %259 = tpu.matmul %257, %258, %cst_76 {dimension_numbers = #tpu.dot_dimension_numbers<[1], [0], [0], [1], [0, 0, 1, 1], [], []>} : vector<8x128xf32>, vector<128x128xf32>, vector<8x128xf32> -> vector<8x128xf32>
    %c0_77 = arith.constant 0 : index
    %c0_78 = arith.constant 0 : index
    %260 = vector.load %arg6[%c0_77, %c0_78] : memref<1x128xf32, #tpu.memory_space<vmem>>, vector<1x128xf32>
    %261 = vector.broadcast %260 : vector<1x128xf32> to vector<8x128xf32>
    %262 = arith.addf %259, %261 : vector<8x128xf32>
    %c0_79 = arith.constant 0 : index
    %c0_80 = arith.constant 0 : index
    %263 = vector.load %arg7[%c0_79, %c0_80] : memref<8x128xf32, #tpu.memory_space<vmem>>, vector<8x128xf32>
    tpu.vector_store %arg7[%c0_79, %c0_80], %262 {strides = array<i32>} : memref<8x128xf32, #tpu.memory_space<vmem>>, vector<8x128xf32>,
    return
  }
  func.func @transform_0(%arg0: i32) -> (i32, i32) {
    %c0_i32 = arith.constant 0 : i32
    %c0_i32_0 = arith.constant 0 : i32
    %c0_i32_1 = arith.constant 0 : i32
    return %c0_i32, %c0_i32_0 : i32, i32
  }
  func.func @transform_1(%arg0: i32) -> (i32, i32) {
    %c0_i32 = arith.constant 0 : i32
    %c0_i32_0 = arith.constant 0 : i32
    %c0_i32_1 = arith.constant 0 : i32
    return %c0_i32, %c0_i32_0 : i32, i32
  }
  func.func @transform_2(%arg0: i32) -> (i32, i32) {
    %c0_i32 = arith.constant 0 : i32
    %c0_i32_0 = arith.constant 0 : i32
    %c0_i32_1 = arith.constant 0 : i32
    return %c0_i32, %c0_i32_0 : i32, i32
  }
  func.func @transform_3(%arg0: i32) -> (i32, i32) {
    %c0_i32 = arith.constant 0 : i32
    %c0_i32_0 = arith.constant 0 : i32
    %c0_i32_1 = arith.constant 0 : i32
    return %c0_i32, %c0_i32_0 : i32, i32
  }
  func.func @transform_4(%arg0: i32) -> (i32, i32) {
    %c0_i32 = arith.constant 0 : i32
    %c0_i32_0 = arith.constant 0 : i32
    %c0_i32_1 = arith.constant 0 : i32
    return %c0_i32, %c0_i32_0 : i32, i32
  }
  func.func @transform_5(%arg0: i32) -> (i32, i32) {
    %c0_i32 = arith.constant 0 : i32
    %c0_i32_0 = arith.constant 0 : i32
    %c0_i32_1 = arith.constant 0 : i32
    return %c0_i32, %c0_i32_0 : i32, i32
  }
  func.func @transform_6(%arg0: i32) -> (i32, i32) {
    %c0_i32 = arith.constant 0 : i32
    %c0_i32_0 = arith.constant 0 : i32
    %c0_i32_1 = arith.constant 0 : i32
    return %c0_i32, %c0_i32_0 : i32, i32
  }
}

</mosaic_0001>

<llo_original>
// kernel: tpu_custom_call.1
$region0: #{tpu_custom_call.1}
  #allocation0 [shape = 'u32[]', space=smem, size = 0x4, offset = 0x4, fixed_abs, tag = 'smem constant byte address 0x4 - core index']
  #allocation1 [shape = 'u32[144,128]{1,0:T(1,128)}', space=vmem, size = 0x12000, scoped, tag = 'internal scratch']
  #allocation2 [shape = 'f32[8,8,512]{2,1,0:T(8,128)}', space=vmem, size = 0x20000, scoped, tag = 'scratch operand']
  %s0 = inlined_call_operand.vmem [shape: f32[64,28], index: 0, kind: input, shape index: {}]
  %s1 = inlined_call_operand.hbm [shape: f32[28,512], index: 1, kind: input, shape index: {}]
  %s2 = inlined_call_operand.hbm [shape: f32[128,512], index: 2, kind: input, shape index: {}]
  %s3 = inlined_call_operand.vmem [shape: f32[1,512], index: 3, kind: input, shape index: {}]
  %s4 = inlined_call_operand.hbm [shape: f32[128,128], index: 4, kind: input, shape index: {}]
  %s5 = inlined_call_operand.vmem [shape: f32[1,128], index: 5, kind: input, shape index: {}]
  %s6 = inlined_call_operand.hbm [shape: f32[8,128], index: 6, kind: output, shape index: {}]
  %s7 = sld [smem:[#allocation0]]
  $region46: #{tpu_custom_call.1} parent=0
    _
  %s9 = ssub.s32 1, %s7
  %s10 = scalar_select 0, %s9, %s7
  $region1: #{tpu_custom_call.1} parent=0
    #allocation3 [shape = 'u8[65536]{0}', space=vmem, size = 0x10000, scoped, tag = 'input window, operand 1, single buffered']
    #allocation4 [shape = 's32[1]{0}', space=sflag, size = 0x4, scoped, tag = 'scoped memory for tpu_custom_call.1']
    #allocation5 [shape = 's32[1]{0}', space=sflag, size = 0x4, scoped, tag = 'scoped memory for tpu_custom_call.1']
    #allocation6 [shape = 'u8[262144]{0}', space=vmem, size = 0x40000, scoped, tag = 'input window, operand 2, single buffered']
    #allocation7 [shape = 's32[1]{0}', space=sflag, size = 0x4, scoped, tag = 'scoped memory for tpu_custom_call.1']
    #allocation8 [shape = 'u8[65536]{0}', space=vmem, size = 0x10000, scoped, tag = 'input window, operand 4, single buffered']
    #allocation9 [shape = 'u8[4096]{0}', space=vmem, size = 0x1000, scoped, tag = 'output window, operand 0, single buffered']
    %11 = vsyncpa [#allocation4], 0
    %12 = vsyncpa [#allocation7], 0
    %13 = vsyncpa [#allocation5], 0
    // Predicated region
    $region2: #{tpu_custom_call.1} parent=1 // pred_check
      _
    $region3: #{tpu_custom_call.1} parent=1 // pred_check_branch
      %15 = sbr.rel (0) target = $region5
    $region4: #{tpu_custom_call.1} parent=1 // pred_region
      _
    $region5: #{tpu_custom_call.1} parent=1 // pred_fallthru
      _
    // Predicated region
    $region6: #{tpu_custom_call.1} parent=1 // pred_check
      _
    $region7: #{tpu_custom_call.1} parent=1 // pred_check_branch
      %17 = sbr.rel (0) target = $region9
    $region8: #{tpu_custom_call.1} parent=1 // pred_region
      %s19 = ssub.s32 2048, 2048
      %20 = vsyncadd [#allocation4], %s19
      %s21 = sshll.u32 [#allocation3], 4
      %s22 = int_to_ptr.vmem [resolvable:$true] %s21
      %27 = dma.hbm_to_vmem [thread:$0]  %s1, 2048, %s22, [#allocation4], 512, 512, 32
    $region9: #{tpu_custom_call.1} parent=1 // pred_fallthru
      _
    // Predicated region
    $region10: #{tpu_custom_call.1} parent=1 // pred_check
      _
    $region11: #{tpu_custom_call.1} parent=1 // pred_check_branch
      %29 = sbr.rel (0) target = $region13
    $region12: #{tpu_custom_call.1} parent=1 // pred_region
      %s31 = ssub.s32 8192, 8192
      %32 = vsyncadd [#allocation7], %s31
      %s33 = sshll.u32 [#allocation6], 4
      %s34 = int_to_ptr.vmem [resolvable:$true] %s33
      %39 = dma.hbm_to_vmem [thread:$0]  %s2, 8192, %s34, [#allocation7], 512, 512, 32
    $region13: #{tpu_custom_call.1} parent=1 // pred_fallthru
      _
    // Predicated region
    $region14: #{tpu_custom_call.1} parent=1 // pred_check
      _
    $region15: #{tpu_custom_call.1} parent=1 // pred_check_branch
      %41 = sbr.rel (0) target = $region17
    $region16: #{tpu_custom_call.1} parent=1 // pred_region
      _
    $region17: #{tpu_custom_call.1} parent=1 // pred_fallthru
      _
    // Predicated region
    $region18: #{tpu_custom_call.1} parent=1 // pred_check
      _
    $region19: #{tpu_custom_call.1} parent=1 // pred_check_branch
      %43 = sbr.rel (0) target = $region21
    $region20: #{tpu_custom_call.1} parent=1 // pred_region
      %s45 = ssub.s32 2048, 2048
      %46 = vsyncadd [#allocation7], %s45
      %s47 = sshll.u32 [#allocation8], 4
      %s48 = int_to_ptr.vmem [resolvable:$true] %s47
      %53 = dma.hbm_to_vmem [thread:$0]  %s4, 2048, %s48, [#allocation7], 128, 128, 8
    $region21: #{tpu_custom_call.1} parent=1 // pred_fallthru
      _
    // Predicated region
    $region22: #{tpu_custom_call.1} parent=1 // pred_check
      _
    $region23: #{tpu_custom_call.1} parent=1 // pred_check_branch
      %55 = sbr.rel (0) target = $region25
    $region24: #{tpu_custom_call.1} parent=1 // pred_region
      _
    $region25: #{tpu_custom_call.1} parent=1 // pred_fallthru
      _
    // Predicated region
    $region26: #{tpu_custom_call.1} parent=1 // pred_check
      _
    $region27: #{tpu_custom_call.1} parent=1 // pred_check_branch
      %57 = sbr.rel (0) target = $region29
    $region28: #{tpu_custom_call.1} parent=1 // pred_region
      %58 = dma.done [#allocation4], 2048
    $region29: #{tpu_custom_call.1} parent=1 // pred_fallthru
      _
    // Predicated region
    $region30: #{tpu_custom_call.1} parent=1 // pred_check
      _
    $region31: #{tpu_custom_call.1} parent=1 // pred_check_branch
      %60 = sbr.rel (0) target = $region33
    $region32: #{tpu_custom_call.1} parent=1 // pred_region
      %61 = dma.done [#allocation7], 8192
    $region33: #{tpu_custom_call.1} parent=1 // pred_fallthru
      _
    // Predicated region
    $region34: #{tpu_custom_call.1} parent=1 // pred_check
      _
    $region35: #{tpu_custom_call.1} parent=1 // pred_check_branch
      %63 = sbr.rel (0) target = $region37
    $region36: #{tpu_custom_call.1} parent=1 // pred_region
      %64 = dma.done [#allocation7], 2048
    $region37: #{tpu_custom_call.1} parent=1 // pred_fallthru
      _
    %v65 = vld [vmem:[%s0] sm:$0xff]
    %v66 = vld [vmem:[%s0 + $0x8] sm:$0xff]
    %v67 = vld [vmem:[%s0 + $0x10] sm:$0xff]
    %v68 = vld [vmem:[%s0 + $0x18] sm:$0xff]
    %v69 = vld [vmem:[%s0 + $0x20] sm:$0xff]
    %v70 = vld [vmem:[%s0 + $0x28] sm:$0xff]
    %v71 = vld [vmem:[%s0 + $0x30] sm:$0xff]
    %v72 = vld [vmem:[%s0 + $0x38] sm:$0xff]
    %v73 = vld [vmem:[#allocation3] sm:$0xff]
    %v74 = vld [vmem:[#allocation3 + $0x8] sm:$0xff]
    %v75 = vld [vmem:[#allocation3 + $0x10] sm:$0xff]
    %v76 = vld [vmem:[#allocation3 + $0x18] sm:$0xff]
    %v77 = vld [vmem:[#allocation3 + $0x20] sm:$0xff]
    %v78 = vld [vmem:[#allocation3 + $0x28] sm:$0xff]
    %v79 = vld [vmem:[#allocation3 + $0x30] sm:$0xff]
    %v80 = vld [vmem:[#allocation3 + $0x38] sm:$0xff]
    %v81 = vld [vmem:[#allocation3 + $0x40] sm:$0xff]
    %v82 = vld [vmem:[#allocation3 + $0x48] sm:$0xff]
    %v83 = vld [vmem:[#allocation3 + $0x50] sm:$0xff]
    %v84 = vld [vmem:[#allocation3 + $0x58] sm:$0xff]
    %v85 = vld [vmem:[#allocation3 + $0x60] sm:$0xf]
    %v86 = vld [vmem:[#allocation3 + $0x68] sm:$0xf]
    %v87 = vld [vmem:[#allocation3 + $0x70] sm:$0xf]
    %v88 = vld [vmem:[#allocation3 + $0x78] sm:$0xf]
    %v89 = vld [vmem:[%s3] sm:$0xf]
    %v91 = vlaneseq
    %v92 = vshrl.u32 %v91, 7
    %v93 = vsub.s32 0, %v92
    %v94 = vrot.slane %v89, %v93
    %v95 = vlaneseq
    %v96 = vshrl.u32 %v95, 7
    %v97 = vsub.s32 1, %v96
    %v98 = vrot.slane %v89, %v97
    %v99 = vlaneseq
    %v100 = vshrl.u32 %v99, 7
    %v101 = vsub.s32 2, %v100
    %v102 = vrot.slane %v89, %v101
    %v103 = vlaneseq
    %v104 = vshrl.u32 %v103, 7
    %v105 = vsub.s32 3, %v104
    %v106 = vrot.slane %v89, %v105
    %vm111 = vcmask 228352
    %v113 = vsel %vm111, %v65, 0
    %v116 = vsel %vm111, %v66, 0
    %v119 = vsel %vm111, %v67, 0
    %v122 = vsel %vm111, %v68, 0
    %v125 = vsel %vm111, %v69, 0
    %v128 = vsel %vm111, %v70, 0
    %v131 = vsel %vm111, %v71, 0
    %v134 = vsel %vm111, %v72, 0
    %vm136 = vcmask 1043456
    %v138 = vsel %vm136, %v85, 0
    %v141 = vsel %vm136, %v86, 0
    %v144 = vsel %vm136, %v87, 0
    %v147 = vsel %vm136, %v88, 0
    %149 = vmatprep.subr.mxu0 %v74
    %150 = vmatpush1.msra.mxu0 %v73
    %151 = vmatprep.subr.mxu0 %v78
    %152 = vmatpush1.msra.mxu0 %v77
    %153 = vmatprep.subr.mxu0 %v82
    %154 = vmatpush1.msra.mxu0 %v81
    %155 = vmatprep.subr.mxu0 %v141
    %156 = vmatpush1.msra.mxu0 %v138
    %157 = vmatprep.subr.mxu0 0.0
    %158 = vmatpush1.msra.mxu0 0.0
    %159 = vmatprep.subr.mxu0 0.0
    %160 = vmatpush1.msra.mxu0 0.0
    %161 = vmatprep.subr.mxu0 0.0
    %162 = vmatpush1.msra.mxu0 0.0
    %163 = vmatprep.subr.mxu0 0.0
    %164 = vmatpush1.msra.mxu0 0.0
    %165 = vmatprep.subr.mxu0 0.0
    %166 = vmatpush1.msra.mxu0 0.0
    %167 = vmatprep.subr.mxu0 0.0
    %168 = vmatpush1.msra.mxu0 0.0
    %169 = vmatprep.subr.mxu0 0.0
    %170 = vmatpush1.msra.mxu0 0.0
    %171 = vmatprep.subr.mxu0 0.0
    %172 = vmatpush1.msra.mxu0 0.0
    %173 = vmatprep.subr.mxu0 0.0
    %174 = vmatpush1.msra.mxu0 0.0
    %175 = vmatprep.subr.mxu0 0.0
    %176 = vmatpush1.msra.mxu0 0.0
    %177 = vmatprep.subr.mxu0 0.0
    %178 = vmatpush1.msra.mxu0 0.0
    %179 = vmatprep.subr.mxu0 0.0
    %180 = vmatpush1.msra.mxu0 0.0
    %181 = vmatprep.subr.mxu0 0.0
    %182 = vmatpush1.msra.mxu0 0.0
    %183 = vmatprep.subr.mxu0 0.0
    %184 = vmatpush1.msra.mxu0 0.0
    %185 = vmatprep.subr.mxu0 0.0
    %186 = vmatpush1.msra.mxu0 0.0
    %187 = vmatprep.subr.mxu0 0.0
    %188 = vmatpush1.msra.mxu0 0.0
    %189 = vmatprep.subr.mxu0 0.0
    %190 = vmatpush1.msra.mxu0 0.0
    %191 = vmatprep.subr.mxu0 0.0
    %192 = vmatpush1.msra.mxu0 0.0
    %193 = vmatprep.subr.mxu0 0.0
    %194 = vmatpush1.msra.mxu0 0.0
    %195 = vmatprep.subr.mxu0 0.0
    %196 = vmatpush1.msra.mxu0 0.0
    %197 = vmatprep.subr.mxu0 0.0
    %198 = vmatpush1.msra.mxu0 0.0
    %199 = vmatprep.subr.mxu0 0.0
    %200 = vmatpush1.msra.mxu0 0.0
    %201 = vmatprep.subr.mxu0 0.0
    %202 = vmatpush1.msra.mxu0 0.0
    %203 = vmatprep.subr.mxu0 0.0
    %204 = vmatpush1.msra.mxu0 0.0
    %205 = vmatprep.subr.mxu0 0.0
    %206 = vmatpush1.msra.mxu0 0.0
    %207 = vmatprep.subr.mxu0 0.0
    %208 = vmatpush1.msra.mxu0 0.0
    %209 = vmatprep.subr.mxu0 0.0
    %210 = vmatpush1.msra.mxu0 0.0
    %211 = vmatprep.subr.mxu0 0.0
    %212 = vmatpush1.msra.mxu0 0.0
    %213 = vmatprep.mubr.f32.mxu0 0.0
    %214 = vmatmul.mubr.f32.gmra.mrb[0].mxu0 %v113
    %v215 = vpop.f32.mrb[0].mxu0
    %v216 = vadd.f32 %v94, %v215
    %v217 = vpop.f32.mrb[0].mxu0
    %v218 = vadd.f32 %v98, %v217
    %219 = vmatprep.mubr.f32.mxu0 0.0
    %220 = vmatmul.mubr.f32.gmra.mrb[0].mxu0 %v116
    %v221 = vpop.f32.mrb[0].mxu0
    %v222 = vadd.f32 %v94, %v221
    %v223 = vpop.f32.mrb[0].mxu0
    %v224 = vadd.f32 %v98, %v223
    %225 = vmatprep.mubr.f32.mxu0 0.0
    %226 = vmatmul.mubr.f32.gmra.mrb[0].mxu0 %v119
    %v227 = vpop.f32.mrb[0].mxu0
    %v228 = vadd.f32 %v94, %v227
    %v229 = vpop.f32.mrb[0].mxu0
    %v230 = vadd.f32 %v98, %v229
    %231 = vmatprep.mubr.f32.mxu0 0.0
    %232 = vmatmul.mubr.f32.gmra.mrb[0].mxu0 %v122
    %v233 = vpop.f32.mrb[0].mxu0
    %v234 = vadd.f32 %v94, %v233
    %v235 = vpop.f32.mrb[0].mxu0
    %v236 = vadd.f32 %v98, %v235
    %237 = vmatprep.mubr.f32.mxu0 0.0
    %238 = vmatmul.mubr.f32.gmra.mrb[0].mxu0 %v125
    %v239 = vpop.f32.mrb[0].mxu0
    %v240 = vadd.f32 %v94, %v239
    %v241 = vpop.f32.mrb[0].mxu0
    %v242 = vadd.f32 %v98, %v241
    %243 = vmatprep.mubr.f32.mxu0 0.0
    %244 = vmatmul.mubr.f32.gmra.mrb[0].mxu0 %v128
    %v245 = vpop.f32.mrb[0].mxu0
    %v246 = vadd.f32 %v94, %v245
    %v247 = vpop.f32.mrb[0].mxu0
    %v248 = vadd.f32 %v98, %v247
    %249 = vmatprep.mubr.f32.mxu0 0.0
    %250 = vmatmul.mubr.f32.gmra.mrb[0].mxu0 %v131
    %v251 = vpop.f32.mrb[0].mxu0
    %v252 = vadd.f32 %v94, %v251
    %v253 = vpop.f32.mrb[0].mxu0
    %v254 = vadd.f32 %v98, %v253
    %255 = vmatprep.mubr.f32.mxu0 0.0
    %256 = vmatmul.mubr.f32.gmra.mrb[0].mxu0 %v134
    %v257 = vpop.f32.mrb[0].mxu0
    %v258 = vadd.f32 %v94, %v257
    %v259 = vpop.f32.mrb[0].mxu0
    %v260 = vadd.f32 %v98, %v259
    %261 = vdwg.mxu0
    %262 = vmatprep.subr.mxu0 %v76
    %263 = vmatpush1.msra.mxu0 %v75
    %264 = vmatprep.subr.mxu0 %v80
    %265 = vmatpush1.msra.mxu0 %v79
    %266 = vmatprep.subr.mxu0 %v84
    %267 = vmatpush1.msra.mxu0 %v83
    %268 = vmatprep.subr.mxu0 %v147
    %269 = vmatpush1.msra.mxu0 %v144
    %270 = vmatprep.subr.mxu0 0.0
    %271 = vmatpush1.msra.mxu0 0.0
    %272 = vmatprep.subr.mxu0 0.0
    %273 = vmatpush1.msra.mxu0 0.0
    %274 = vmatprep.subr.mxu0 0.0
    %275 = vmatpush1.msra.mxu0 0.0
    %276 = vmatprep.subr.mxu0 0.0
    %277 = vmatpush1.msra.mxu0 0.0
    %278 = vmatprep.subr.mxu0 0.0
    %279 = vmatpush1.msra.mxu0 0.0
    %280 = vmatprep.subr.mxu0 0.0
    %281 = vmatpush1.msra.mxu0 0.0
    %282 = vmatprep.subr.mxu0 0.0
    %283 = vmatpush1.msra.mxu0 0.0
    %284 = vmatprep.subr.mxu0 0.0
    %285 = vmatpush1.msra.mxu0 0.0
    %286 = vmatprep.subr.mxu0 0.0
    %287 = vmatpush1.msra.mxu0 0.0
    %288 = vmatprep.subr.mxu0 0.0
    %289 = vmatpush1.msra.mxu0 0.0
    %290 = vmatprep.subr.mxu0 0.0
    %291 = vmatpush1.msra.mxu0 0.0
    %292 = vmatprep.subr.mxu0 0.0
    %293 = vmatpush1.msra.mxu0 0.0
    %294 = vmatprep.subr.mxu0 0.0
    %295 = vmatpush1.msra.mxu0 0.0
    %296 = vmatprep.subr.mxu0 0.0
    %297 = vmatpush1.msra.mxu0 0.0
    %298 = vmatprep.subr.mxu0 0.0
    %299 = vmatpush1.msra.mxu0 0.0
    %300 = vmatprep.subr.mxu0 0.0
    %301 = vmatpush1.msra.mxu0 0.0
    %302 = vmatprep.subr.mxu0 0.0
    %303 = vmatpush1.msra.mxu0 0.0
    %304 = vmatprep.subr.mxu0 0.0
    %305 = vmatpush1.msra.mxu0 0.0
    %306 = vmatprep.subr.mxu0 0.0
    %307 = vmatpush1.msra.mxu0 0.0
    %308 = vmatprep.subr.mxu0 0.0
    %309 = vmatpush1.msra.mxu0 0.0
    %310 = vmatprep.subr.mxu0 0.0
    %311 = vmatpush1.msra.mxu0 0.0
    %312 = vmatprep.subr.mxu0 0.0
    %313 = vmatpush1.msra.mxu0 0.0
    %314 = vmatprep.subr.mxu0 0.0
    %315 = vmatpush1.msra.mxu0 0.0
    %316 = vmatprep.subr.mxu0 0.0
    %317 = vmatpush1.msra.mxu0 0.0
    %318 = vmatprep.subr.mxu0 0.0
    %319 = vmatpush1.msra.mxu0 0.0
    %320 = vmatprep.subr.mxu0 0.0
    %321 = vmatpush1.msra.mxu0 0.0
    %322 = vmatprep.subr.mxu0 0.0
    %323 = vmatpush1.msra.mxu0 0.0
    %324 = vmatprep.subr.mxu0 0.0
    %325 = vmatpush1.msra.mxu0 0.0
    %326 = vmatprep.mubr.f32.mxu0 0.0
    %327 = vmatmul.mubr.f32.gmra.mrb[0].mxu0 %v113
    %v328 = vpop.f32.mrb[0].mxu0
    %v329 = vadd.f32 %v102, %v328
    %v330 = vpop.f32.mrb[0].mxu0
    %v331 = vadd.f32 %v106, %v330
    %332 = vmatprep.mubr.f32.mxu0 0.0
    %333 = vmatmul.mubr.f32.gmra.mrb[0].mxu0 %v116
    %v334 = vpop.f32.mrb[0].mxu0
    %v335 = vadd.f32 %v102, %v334
    %v336 = vpop.f32.mrb[0].mxu0
    %v337 = vadd.f32 %v106, %v336
    %338 = vmatprep.mubr.f32.mxu0 0.0
    %339 = vmatmul.mubr.f32.gmra.mrb[0].mxu0 %v119
    %v340 = vpop.f32.mrb[0].mxu0
    %v341 = vadd.f32 %v102, %v340
    %v342 = vpop.f32.mrb[0].mxu0
    %v343 = vadd.f32 %v106, %v342
    %344 = vmatprep.mubr.f32.mxu0 0.0
    %345 = vmatmul.mubr.f32.gmra.mrb[0].mxu0 %v122
    %v346 = vpop.f32.mrb[0].mxu0
    %v347 = vadd.f32 %v102, %v346
    %v348 = vpop.f32.mrb[0].mxu0
    %v349 = vadd.f32 %v106, %v348
    %350 = vmatprep.mubr.f32.mxu0 0.0
    %351 = vmatmul.mubr.f32.gmra.mrb[0].mxu0 %v125
    %v352 = vpop.f32.mrb[0].mxu0
    %v353 = vadd.f32 %v102, %v352
    %v354 = vpop.f32.mrb[0].mxu0
    %v355 = vadd.f32 %v106, %v354
    %356 = vmatprep.mubr.f32.mxu0 0.0
    %357 = vmatmul.mubr.f32.gmra.mrb[0].mxu0 %v128
    %v358 = vpop.f32.mrb[0].mxu0
    %v359 = vadd.f32 %v102, %v358
    %v360 = vpop.f32.mrb[0].mxu0
    %v361 = vadd.f32 %v106, %v360
    %362 = vmatprep.mubr.f32.mxu0 0.0
    %363 = vmatmul.mubr.f32.gmra.mrb[0].mxu0 %v131
    %v364 = vpop.f32.mrb[0].mxu0
    %v365 = vadd.f32 %v102, %v364
    %v366 = vpop.f32.mrb[0].mxu0
    %v367 = vadd.f32 %v106, %v366
    %368 = vmatprep.mubr.f32.mxu0 0.0
    %369 = vmatmul.mubr.f32.gmra.mrb[0].mxu0 %v134
    %v370 = vpop.f32.mrb[0].mxu0
    %v371 = vadd.f32 %v102, %v370
    %v372 = vpop.f32.mrb[0].mxu0
    %v373 = vadd.f32 %v106, %v372
    %374 = vdwg.mxu0
    %375 = vst [vmem:[#allocation2] sm:$0xff] %v216
    %376 = vst [vmem:[#allocation2 + $0x8] sm:$0xff] %v218
    %377 = vst [vmem:[#allocation2 + $0x10] sm:$0xff] %v329
    %378 = vst [vmem:[#allocation2 + $0x18] sm:$0xff] %v331
    %379 = vst [vmem:[#allocation2 + $0x20] sm:$0xff] %v222
    %380 = vst [vmem:[#allocation2 + $0x28] sm:$0xff] %v224
    %381 = vst [vmem:[#allocation2 + $0x30] sm:$0xff] %v335
    %382 = vst [vmem:[#allocation2 + $0x38] sm:$0xff] %v337
    %383 = vst [vmem:[#allocation2 + $0x40] sm:$0xff] %v228
    %384 = vst [vmem:[#allocation2 + $0x48] sm:$0xff] %v230
    %385 = vst [vmem:[#allocation2 + $0x50] sm:$0xff] %v341
    %386 = vst [vmem:[#allocation2 + $0x58] sm:$0xff] %v343
    %387 = vst [vmem:[#allocation2 + $0x60] sm:$0xff] %v234
    %388 = vst [vmem:[#allocation2 + $0x68] sm:$0xff] %v236
    %389 = vst [vmem:[#allocation2 + $0x70] sm:$0xff] %v347
    %390 = vst [vmem:[#allocation2 + $0x78] sm:$0xff] %v349
    %391 = vst [vmem:[#allocation2 + $0x80] sm:$0xff] %v240
    %392 = vst [vmem:[#allocation2 + $0x88] sm:$0xff] %v242
    %393 = vst [vmem:[#allocation2 + $0x90] sm:$0xff] %v353
    %394 = vst [vmem:[#allocation2 + $0x98] sm:$0xff] %v355
    %395 = vst [vmem:[#allocation2 + $0xa0] sm:$0xff] %v246
    %396 = vst [vmem:[#allocation2 + $0xa8] sm:$0xff] %v248
    %397 = vst [vmem:[#allocation2 + $0xb0] sm:$0xff] %v359
    %398 = vst [vmem:[#allocation2 + $0xb8] sm:$0xff] %v361
    %399 = vst [vmem:[#allocation2 + $0xc0] sm:$0xff] %v252
    %400 = vst [vmem:[#allocation2 + $0xc8] sm:$0xff] %v254
    %401 = vst [vmem:[#allocation2 + $0xd0] sm:$0xff] %v365
    %402 = vst [vmem:[#allocation2 + $0xd8] sm:$0xff] %v367
    %403 = vst [vmem:[#allocation2 + $0xe0] sm:$0xff] %v258
    %404 = vst [vmem:[#allocation2 + $0xe8] sm:$0xff] %v260
    %405 = vst [vmem:[#allocation2 + $0xf0] sm:$0xff] %v371
    %406 = vst [vmem:[#allocation2 + $0xf8] sm:$0xff] %v373
    %v407 = vld [vmem:[#allocation2] sm:$0xff]
    %v408 = vld [vmem:[#allocation2 + $0x8] sm:$0xff]
    %v409 = vld [vmem:[#allocation2 + $0x10] sm:$0xff]
    %v410 = vld [vmem:[#allocation2 + $0x18] sm:$0xff]
    %v411 = vld [vmem:[#allocation6] sm:$0xff]
    %v412 = vld [vmem:[#allocation6 + $0x8] sm:$0xff]
    %v413 = vld [vmem:[#allocation6 + $0x10] sm:$0xff]
    %v414 = vld [vmem:[#allocation6 + $0x18] sm:$0xff]
    %v415 = vld [vmem:[#allocation6 + $0x20] sm:$0xff]
    %v416 = vld [vmem:[#allocation6 + $0x28] sm:$0xff]
    %v417 = vld [vmem:[#allocation6 + $0x30] sm:$0xff]
    %v418 = vld [vmem:[#allocation6 + $0x38] sm:$0xff]
    %v419 = vld [vmem:[#allocation6 + $0x40] sm:$0xff]
    %v420 = vld [vmem:[#allocation6 + $0x48] sm:$0xff]
    %v421 = vld [vmem:[#allocation6 + $0x50] sm:$0xff]
    %v422 = vld [vmem:[#allocation6 + $0x58] sm:$0xff]
    %v423 = vld [vmem:[#allocation6 + $0x60] sm:$0xff]
    %v424 = vld [vmem:[#allocation6 + $0x68] sm:$0xff]
    %v425 = vld [vmem:[#allocation6 + $0x70] sm:$0xff]
    %v426 = vld [vmem:[#allocation6 + $0x78] sm:$0xff]
    %v427 = vld [vmem:[#allocation6 + $0x80] sm:$0xff]
    %v428 = vld [vmem:[#allocation6 + $0x88] sm:$0xff]
    %v429 = vld [vmem:[#allocation6 + $0x90] sm:$0xff]
    %v430 = vld [vmem:[#allocation6 + $0x98] sm:$0xff]
    %v431 = vld [vmem:[#allocation6 + $0xa0] sm:$0xff]
    %v432 = vld [vmem:[#allocation6 + $0xa8] sm:$0xff]
    %v433 = vld [vmem:[#allocation6 + $0xb0] sm:$0xff]
    %v434 = vld [vmem:[#allocation6 + $0xb8] sm:$0xff]
    %v435 = vld [vmem:[#allocation6 + $0xc0] sm:$0xff]
    %v436 = vld [vmem:[#allocation6 + $0xc8] sm:$0xff]
    %v437 = vld [vmem:[#allocation6 + $0xd0] sm:$0xff]
    %v438 = vld [vmem:[#allocation6 + $0xd8] sm:$0xff]
    %v439 = vld [vmem:[#allocation6 + $0xe0] sm:$0xff]
    %v440 = vld [vmem:[#allocation6 + $0xe8] sm:$0xff]
    %v441 = vld [vmem:[#allocation6 + $0xf0] sm:$0xff]
    %v442 = vld [vmem:[#allocation6 + $0xf8] sm:$0xff]
    %v443 = vld [vmem:[#allocation6 + $0x100] sm:$0xff]
    %v444 = vld [vmem:[#allocation6 + $0x108] sm:$0xff]
    %v445 = vld [vmem:[#allocation6 + $0x110] sm:$0xff]
    %v446 = vld [vmem:[#allocation6 + $0x118] sm:$0xff]
    %v447 = vld [vmem:[#allocation6 + $0x120] sm:$0xff]
    %v448 = vld [vmem:[#allocation6 + $0x128] sm:$0xff]
    %v449 = vld [vmem:[#allocation6 + $0x130] sm:$0xff]
    %v450 = vld [vmem:[#allocation6 + $0x138] sm:$0xff]
    %v451 = vld [vmem:[#allocation6 + $0x140] sm:$0xff]
    %v452 = vld [vmem:[#allocation6 + $0x148] sm:$0xff]
    %v453 = vld [vmem:[#allocation6 + $0x150] sm:$0xff]
    %v454 = vld [vmem:[#allocation6 + $0x158] sm:$0xff]
    %v455 = vld [vmem:[#allocation6 + $0x160] sm:$0xff]
    %v456 = vld [vmem:[#allocation6 + $0x168] sm:$0xff]
    %v457 = vld [vmem:[#allocation6 + $0x170] sm:$0xff]
    %v458 = vld [vmem:[#allocation6 + $0x178] sm:$0xff]
    %v459 = vld [vmem:[#allocation6 + $0x180] sm:$0xff]
    %v460 = vld [vmem:[#allocation6 + $0x188] sm:$0xff]
    %v461 = vld [vmem:[#allocation6 + $0x190] sm:$0xff]
    %v462 = vld [vmem:[#allocation6 + $0x198] sm:$0xff]
    %v463 = vld [vmem:[#allocation6 + $0x1a0] sm:$0xff]
    %v464 = vld [vmem:[#allocation6 + $0x1a8] sm:$0xff]
    %v465 = vld [vmem:[#allocation6 + $0x1b0] sm:$0xff]
    %v466 = vld [vmem:[#allocation6 + $0x1b8] sm:$0xff]
    %v467 = vld [vmem:[#allocation6 + $0x1c0] sm:$0xff]
    %v468 = vld [vmem:[#allocation6 + $0x1c8] sm:$0xff]
    %v469 = vld [vmem:[#allocation6 + $0x1d0] sm:$0xff]
    %v470 = vld [vmem:[#allocation6 + $0x1d8] sm:$0xff]
    %v471 = vld [vmem:[#allocation6 + $0x1e0] sm:$0xff]
    %v472 = vld [vmem:[#allocation6 + $0x1e8] sm:$0xff]
    %v473 = vld [vmem:[#allocation6 + $0x1f0] sm:$0xff]
    %v474 = vld [vmem:[#allocation6 + $0x1f8] sm:$0xff]
    %475 = vmatprep.subr.mxu0 %v412
    %476 = vmatpush1.msra.mxu0 %v411
    %477 = vmatprep.subr.mxu0 %v416
    %478 = vmatpush1.msra.mxu0 %v415
    %479 = vmatprep.subr.mxu0 %v420
    %480 = vmatpush1.msra.mxu0 %v419
    %481 = vmatprep.subr.mxu0 %v424
    %482 = vmatpush1.msra.mxu0 %v423
    %483 = vmatprep.subr.mxu0 %v428
    %484 = vmatpush1.msra.mxu0 %v427
    %485 = vmatprep.subr.mxu0 %v432
    %486 = vmatpush1.msra.mxu0 %v431
    %487 = vmatprep.subr.mxu0 %v436
    %488 = vmatpush1.msra.mxu0 %v435
    %489 = vmatprep.subr.mxu0 %v440
    %490 = vmatpush1.msra.mxu0 %v439
    %491 = vmatprep.subr.mxu0 %v444
    %492 = vmatpush1.msra.mxu0 %v443
    %493 = vmatprep.subr.mxu0 %v448
    %494 = vmatpush1.msra.mxu0 %v447
    %495 = vmatprep.subr.mxu0 %v452
    %496 = vmatpush1.msra.mxu0 %v451
    %497 = vmatprep.subr.mxu0 %v456
    %498 = vmatpush1.msra.mxu0 %v455
    %499 = vmatprep.subr.mxu0 %v460
    %500 = vmatpush1.msra.mxu0 %v459
    %501 = vmatprep.subr.mxu0 %v464
    %502 = vmatpush1.msra.mxu0 %v463
    %503 = vmatprep.subr.mxu0 %v468
    %504 = vmatpush1.msra.mxu0 %v467
    %505 = vmatprep.subr.mxu0 %v472
    %506 = vmatpush1.msra.mxu0 %v471
    %507 = vmatprep.subr.mxu0 0.0
    %508 = vmatpush1.msra.mxu0 0.0
    %509 = vmatprep.subr.mxu0 0.0
    %510 = vmatpush1.msra.mxu0 0.0
    %511 = vmatprep.subr.mxu0 0.0
    %512 = vmatpush1.msra.mxu0 0.0
    %513 = vmatprep.subr.mxu0 0.0
    %514 = vmatpush1.msra.mxu0 0.0
    %515 = vmatprep.subr.mxu0 0.0
    %516 = vmatpush1.msra.mxu0 0.0
    %517 = vmatprep.subr.mxu0 0.0
    %518 = vmatpush1.msra.mxu0 0.0
    %519 = vmatprep.subr.mxu0 0.0
    %520 = vmatpush1.msra.mxu0 0.0
    %521 = vmatprep.subr.mxu0 0.0
    %522 = vmatpush1.msra.mxu0 0.0
    %523 = vmatprep.subr.mxu0 0.0
    %524 = vmatpush1.msra.mxu0 0.0
    %525 = vmatprep.subr.mxu0 0.0
    %526 = vmatpush1.msra.mxu0 0.0
    %527 = vmatprep.subr.mxu0 0.0
    %528 = vmatpush1.msra.mxu0 0.0
    %529 = vmatprep.subr.mxu0 0.0
    %530 = vmatpush1.msra.mxu0 0.0
    %531 = vmatprep.subr.mxu0 0.0
    %532 = vmatpush1.msra.mxu0 0.0
    %533 = vmatprep.subr.mxu0 0.0
    %534 = vmatpush1.msra.mxu0 0.0
    %535 = vmatprep.subr.mxu0 0.0
    %536 = vmatpush1.msra.mxu0 0.0
    %537 = vmatprep.subr.mxu0 0.0
    %538 = vmatpush1.msra.mxu0 0.0
    %539 = vmatprep.mubr.f32.mxu0 0.0
    %540 = vmatmul.mubr.f32.gmra.mrb[0].mxu0 0.0
    %v541 = vpop.f32.mrb[0].mxu0
    %v542 = vadd.f32 0.0, %v541
    %v543 = vpop.f32.mrb[0].mxu0
    %v544 = vadd.f32 0.0, %v543
    %545 = vdwg.mxu0
    %546 = vmatprep.subr.mxu0 %v414
    %547 = vmatpush1.msra.mxu0 %v413
    %548 = vmatprep.subr.mxu0 %v418
    %549 = vmatpush1.msra.mxu0 %v417
    %550 = vmatprep.subr.mxu0 %v422
    %551 = vmatpush1.msra.mxu0 %v421
    %552 = vmatprep.subr.mxu0 %v426
    %553 = vmatpush1.msra.mxu0 %v425
    %554 = vmatprep.subr.mxu0 %v430
    %555 = vmatpush1.msra.mxu0 %v429
    %556 = vmatprep.subr.mxu0 %v434
    %557 = vmatpush1.msra.mxu0 %v433
    %558 = vmatprep.subr.mxu0 %v438
    %559 = vmatpush1.msra.mxu0 %v437
    %560 = vmatprep.subr.mxu0 %v442
    %561 = vmatpush1.msra.mxu0 %v441
    %562 = vmatprep.subr.mxu0 %v446
    %563 = vmatpush1.msra.mxu0 %v445
    %564 = vmatprep.subr.mxu0 %v450
    %565 = vmatpush1.msra.mxu0 %v449
    %566 = vmatprep.subr.mxu0 %v454
    %567 = vmatpush1.msra.mxu0 %v453
    %568 = vmatprep.subr.mxu0 %v458
    %569 = vmatpush1.msra.mxu0 %v457
    %570 = vmatprep.subr.mxu0 %v462
    %571 = vmatpush1.msra.mxu0 %v461
    %572 = vmatprep.subr.mxu0 %v466
    %573 = vmatpush1.msra.mxu0 %v465
    %574 = vmatprep.subr.mxu0 %v470
    %575 = vmatpush1.msra.mxu0 %v469
    %576 = vmatprep.subr.mxu0 %v474
    %577 = vmatpush1.msra.mxu0 %v473
    %578 = vmatprep.subr.mxu0 0.0
    %579 = vmatpush1.msra.mxu0 0.0
    %580 = vmatprep.subr.mxu0 0.0
    %581 = vmatpush1.msra.mxu0 0.0
    %582 = vmatprep.subr.mxu0 0.0
    %583 = vmatpush1.msra.mxu0 0.0
    %584 = vmatprep.subr.mxu0 0.0
    %585 = vmatpush1.msra.mxu0 0.0
    %586 = vmatprep.subr.mxu0 0.0
    %587 = vmatpush1.msra.mxu0 0.0
    %588 = vmatprep.subr.mxu0 0.0
    %589 = vmatpush1.msra.mxu0 0.0
    %590 = vmatprep.subr.mxu0 0.0
    %591 = vmatpush1.msra.mxu0 0.0
    %592 = vmatprep.subr.mxu0 0.0
    %593 = vmatpush1.msra.mxu0 0.0
    %594 = vmatprep.subr.mxu0 0.0
    %595 = vmatpush1.msra.mxu0 0.0
    %596 = vmatprep.subr.mxu0 0.0
    %597 = vmatpush1.msra.mxu0 0.0
    %598 = vmatprep.subr.mxu0 0.0
    %599 = vmatpush1.msra.mxu0 0.0
    %600 = vmatprep.subr.mxu0 0.0
    %601 = vmatpush1.msra.mxu0 0.0
    %602 = vmatprep.subr.mxu0 0.0
    %603 = vmatpush1.msra.mxu0 0.0
    %604 = vmatprep.subr.mxu0 0.0
    %605 = vmatpush1.msra.mxu0 0.0
    %606 = vmatprep.subr.mxu0 0.0
    %607 = vmatpush1.msra.mxu0 0.0
    %608 = vmatprep.subr.mxu0 0.0
    %609 = vmatpush1.msra.mxu0 0.0
    %610 = vmatprep.mubr.f32.mxu0 0.0
    %611 = vmatmul.mubr.f32.gmra.mrb[0].mxu0 0.0
    %v612 = vpop.f32.mrb[0].mxu0
    %v613 = vadd.f32 0.0, %v612
    %v614 = vpop.f32.mrb[0].mxu0
    %v615 = vadd.f32 0.0, %v614
    %616 = vdwg.mxu0
    %v617 = vadd.f32 %v407, %v542
    %v618 = vadd.f32 %v408, %v544
    %v619 = vadd.f32 %v409, %v613
    %v620 = vadd.f32 %v410, %v615
    %v621 = vxor.u32 %v617, 2147483648
    %v622 = vmul.f32 %v621, 1.442695
    %v623 = vpow.pop %v622
    %v624 = vadd.f32 %v623, 1.0
    %v625 = vrcp.pop %v624
    %v626 = vmul.f32 1.0, %v625
    %v627 = vxor.u32 %v618, 2147483648
    %v628 = vmul.f32 %v627, 1.442695
    %v629 = vpow.pop %v628
    %v630 = vadd.f32 %v629, 1.0
    %v631 = vrcp.pop %v630
    %v632 = vmul.f32 1.0, %v631
    %v633 = vtanh.pop %v619
    %v634 = vxor.u32 %v620, 2147483648
    %v635 = vmul.f32 %v634, 1.442695
    %v636 = vpow.pop %v635
    %v637 = vadd.f32 %v636, 1.0
    %v638 = vrcp.pop %v637
    %v639 = vmul.f32 1.0, %v638
    %v640 = vmul.f32 %v632, 0.0
    %v641 = vmul.f32 %v626, %v633
    %v642 = vadd.f32 %v640, %v641
    %v643 = vtanh.pop %v642
    %v644 = vmul.f32 %v639, %v643
    %s645 = scalar_lea.vmem [#allocation2], 32
    %v646 = vld [vmem:[%s645] sm:$0xff]
    %v647 = vld [vmem:[%s645 + $0x8] sm:$0xff]
    %v648 = vld [vmem:[%s645 + $0x10] sm:$0xff]
    %v649 = vld [vmem:[%s645 + $0x18] sm:$0xff]
    %650 = vmatprep.subr.mxu0 %v412
    %651 = vmatpush1.msra.mxu0 %v411
    %652 = vmatprep.subr.mxu0 %v416
    %653 = vmatpush1.msra.mxu0 %v415
    %654 = vmatprep.subr.mxu0 %v420
    %655 = vmatpush1.msra.mxu0 %v419
    %656 = vmatprep.subr.mxu0 %v424
    %657 = vmatpush1.msra.mxu0 %v423
    %658 = vmatprep.subr.mxu0 %v428
    %659 = vmatpush1.msra.mxu0 %v427
    %660 = vmatprep.subr.mxu0 %v432
    %661 = vmatpush1.msra.mxu0 %v431
    %662 = vmatprep.subr.mxu0 %v436
    %663 = vmatpush1.msra.mxu0 %v435
    %664 = vmatprep.subr.mxu0 %v440
    %665 = vmatpush1.msra.mxu0 %v439
    %666 = vmatprep.subr.mxu0 %v444
    %667 = vmatpush1.msra.mxu0 %v443
    %668 = vmatprep.subr.mxu0 %v448
    %669 = vmatpush1.msra.mxu0 %v447
    %670 = vmatprep.subr.mxu0 %v452
    %671 = vmatpush1.msra.mxu0 %v451
    %672 = vmatprep.subr.mxu0 %v456
    %673 = vmatpush1.msra.mxu0 %v455
    %674 = vmatprep.subr.mxu0 %v460
    %675 = vmatpush1.msra.mxu0 %v459
    %676 = vmatprep.subr.mxu0 %v464
    %677 = vmatpush1.msra.mxu0 %v463
    %678 = vmatprep.subr.mxu0 %v468
    %679 = vmatpush1.msra.mxu0 %v467
    %680 = vmatprep.subr.mxu0 %v472
    %681 = vmatpush1.msra.mxu0 %v471
    %682 = vmatprep.subr.mxu0 0.0
    %683 = vmatpush1.msra.mxu0 0.0
    %684 = vmatprep.subr.mxu0 0.0
    %685 = vmatpush1.msra.mxu0 0.0
    %686 = vmatprep.subr.mxu0 0.0
    %687 = vmatpush1.msra.mxu0 0.0
    %688 = vmatprep.subr.mxu0 0.0
    %689 = vmatpush1.msra.mxu0 0.0
    %690 = vmatprep.subr.mxu0 0.0
    %691 = vmatpush1.msra.mxu0 0.0
    %692 = vmatprep.subr.mxu0 0.0
    %693 = vmatpush1.msra.mxu0 0.0
    %694 = vmatprep.subr.mxu0 0.0
    %695 = vmatpush1.msra.mxu0 0.0
    %696 = vmatprep.subr.mxu0 0.0
    %697 = vmatpush1.msra.mxu0 0.0
    %698 = vmatprep.subr.mxu0 0.0
    %699 = vmatpush1.msra.mxu0 0.0
    %700 = vmatprep.subr.mxu0 0.0
    %701 = vmatpush1.msra.mxu0 0.0
    %702 = vmatprep.subr.mxu0 0.0
    %703 = vmatpush1.msra.mxu0 0.0
    %704 = vmatprep.subr.mxu0 0.0
    %705 = vmatpush1.msra.mxu0 0.0
    %706 = vmatprep.subr.mxu0 0.0
    %707 = vmatpush1.msra.mxu0 0.0
    %708 = vmatprep.subr.mxu0 0.0
    %709 = vmatpush1.msra.mxu0 0.0
    %710 = vmatprep.subr.mxu0 0.0
    %711 = vmatpush1.msra.mxu0 0.0
    %712 = vmatprep.subr.mxu0 0.0
    %713 = vmatpush1.msra.mxu0 0.0
    %714 = vmatprep.mubr.f32.mxu0 0.0
    %715 = vmatmul.mubr.f32.gmra.mrb[0].mxu0 %v644
    %v716 = vpop.f32.mrb[0].mxu0
    %v717 = vadd.f32 0.0, %v716
    %v718 = vpop.f32.mrb[0].mxu0
    %v719 = vadd.f32 0.0, %v718
    %720 = vdwg.mxu0
    %721 = vmatprep.subr.mxu0 %v414
    %722 = vmatpush1.msra.mxu0 %v413
    %723 = vmatprep.subr.mxu0 %v418
    %724 = vmatpush1.msra.mxu0 %v417
    %725 = vmatprep.subr.mxu0 %v422
    %726 = vmatpush1.msra.mxu0 %v421
    %727 = vmatprep.subr.mxu0 %v426
    %728 = vmatpush1.msra.mxu0 %v425
    %729 = vmatprep.subr.mxu0 %v430
    %730 = vmatpush1.msra.mxu0 %v429
    %731 = vmatprep.subr.mxu0 %v434
    %732 = vmatpush1.msra.mxu0 %v433
    %733 = vmatprep.subr.mxu0 %v438
    %734 = vmatpush1.msra.mxu0 %v437
    %735 = vmatprep.subr.mxu0 %v442
    %736 = vmatpush1.msra.mxu0 %v441
    %737 = vmatprep.subr.mxu0 %v446
    %738 = vmatpush1.msra.mxu0 %v445
    %739 = vmatprep.subr.mxu0 %v450
    %740 = vmatpush1.msra.mxu0 %v449
    %741 = vmatprep.subr.mxu0 %v454
    %742 = vmatpush1.msra.mxu0 %v453
    %743 = vmatprep.subr.mxu0 %v458
    %744 = vmatpush1.msra.mxu0 %v457
    %745 = vmatprep.subr.mxu0 %v462
    %746 = vmatpush1.msra.mxu0 %v461
    %747 = vmatprep.subr.mxu0 %v466
    %748 = vmatpush1.msra.mxu0 %v465
    %749 = vmatprep.subr.mxu0 %v470
    %750 = vmatpush1.msra.mxu0 %v469
    %751 = vmatprep.subr.mxu0 %v474
    %752 = vmatpush1.msra.mxu0 %v473
    %753 = vmatprep.subr.mxu0 0.0
    %754 = vmatpush1.msra.mxu0 0.0
    %755 = vmatprep.subr.mxu0 0.0
    %756 = vmatpush1.msra.mxu0 0.0
    %757 = vmatprep.subr.mxu0 0.0
    %758 = vmatpush1.msra.mxu0 0.0
    %759 = vmatprep.subr.mxu0 0.0
    %760 = vmatpush1.msra.mxu0 0.0
    %761 = vmatprep.subr.mxu0 0.0
    %762 = vmatpush1.msra.mxu0 0.0
    %763 = vmatprep.subr.mxu0 0.0
    %764 = vmatpush1.msra.mxu0 0.0
    %765 = vmatprep.subr.mxu0 0.0
    %766 = vmatpush1.msra.mxu0 0.0
    %767 = vmatprep.subr.mxu0 0.0
    %768 = vmatpush1.msra.mxu0 0.0
    %769 = vmatprep.subr.mxu0 0.0
    %770 = vmatpush1.msra.mxu0 0.0
    %771 = vmatprep.subr.mxu0 0.0
    %772 = vmatpush1.msra.mxu0 0.0
    %773 = vmatprep.subr.mxu0 0.0
    %774 = vmatpush1.msra.mxu0 0.0
    %775 = vmatprep.subr.mxu0 0.0
    %776 = vmatpush1.msra.mxu0 0.0
    %777 = vmatprep.subr.mxu0 0.0
    %778 = vmatpush1.msra.mxu0 0.0
    %779 = vmatprep.subr.mxu0 0.0
    %780 = vmatpush1.msra.mxu0 0.0
    %781 = vmatprep.subr.mxu0 0.0
    %782 = vmatpush1.msra.mxu0 0.0
    %783 = vmatprep.subr.mxu0 0.0
    %784 = vmatpush1.msra.mxu0 0.0
    %785 = vmatprep.mubr.f32.mxu0 0.0
    %786 = vmatmul.mubr.f32.gmra.mrb[0].mxu0 %v644
    %v787 = vpop.f32.mrb[0].mxu0
    %v788 = vadd.f32 0.0, %v787
    %v789 = vpop.f32.mrb[0].mxu0
    %v790 = vadd.f32 0.0, %v789
    %791 = vdwg.mxu0
    %v792 = vadd.f32 %v646, %v717
    %v793 = vadd.f32 %v647, %v719
    %v794 = vadd.f32 %v648, %v788
    %v795 = vadd.f32 %v649, %v790
    %v796 = vxor.u32 %v792, 2147483648
    %v797 = vmul.f32 %v796, 1.442695
    %v798 = vpow.pop %v797
    %v799 = vadd.f32 %v798, 1.0
    %v800 = vrcp.pop %v799
    %v801 = vmul.f32 1.0, %v800
    %v802 = vxor.u32 %v793, 2147483648
    %v803 = vmul.f32 %v802, 1.442695
    %v804 = vpow.pop %v803
    %v805 = vadd.f32 %v804, 1.0
    %v806 = vrcp.pop %v805
    %v807 = vmul.f32 1.0, %v806
    %v808 = vtanh.pop %v794
    %v809 = vxor.u32 %v795, 2147483648
    %v810 = vmul.f32 %v809, 1.442695
    %v811 = vpow.pop %v810
    %v812 = vadd.f32 %v811, 1.0
    %v813 = vrcp.pop %v812
    %v814 = vmul.f32 1.0, %v813
    %v815 = vmul.f32 %v807, %v642
    %v816 = vmul.f32 %v801, %v808
    %v817 = vadd.f32 %v815, %v816
    %v818 = vtanh.pop %v817
    %v819 = vmul.f32 %v814, %v818
    %s820 = scalar_lea.vmem [#allocation2], 64
    %v821 = vld [vmem:[%s820] sm:$0xff]
    %v822 = vld [vmem:[%s820 + $0x8] sm:$0xff]
    %v823 = vld [vmem:[%s820 + $0x10] sm:$0xff]
    %v824 = vld [vmem:[%s820 + $0x18] sm:$0xff]
    %825 = vmatprep.subr.mxu0 %v412
    %826 = vmatpush1.msra.mxu0 %v411
    %827 = vmatprep.subr.mxu0 %v416
    %828 = vmatpush1.msra.mxu0 %v415
    %829 = vmatprep.subr.mxu0 %v420
    %830 = vmatpush1.msra.mxu0 %v419
    %831 = vmatprep.subr.mxu0 %v424
    %832 = vmatpush1.msra.mxu0 %v423
    %833 = vmatprep.subr.mxu0 %v428
    %834 = vmatpush1.msra.mxu0 %v427
    %835 = vmatprep.subr.mxu0 %v432
    %836 = vmatpush1.msra.mxu0 %v431
    %837 = vmatprep.subr.mxu0 %v436
    %838 = vmatpush1.msra.mxu0 %v435
    %839 = vmatprep.subr.mxu0 %v440
    %840 = vmatpush1.msra.mxu0 %v439
    %841 = vmatprep.subr.mxu0 %v444
    %842 = vmatpush1.msra.mxu0 %v443
    %843 = vmatprep.subr.mxu0 %v448
    %844 = vmatpush1.msra.mxu0 %v447
    %845 = vmatprep.subr.mxu0 %v452
    %846 = vmatpush1.msra.mxu0 %v451
    %847 = vmatprep.subr.mxu0 %v456
    %848 = vmatpush1.msra.mxu0 %v455
    %849 = vmatprep.subr.mxu0 %v460
    %850 = vmatpush1.msra.mxu0 %v459
    %851 = vmatprep.subr.mxu0 %v464
    %852 = vmatpush1.msra.mxu0 %v463
    %853 = vmatprep.subr.mxu0 %v468
    %854 = vmatpush1.msra.mxu0 %v467
    %855 = vmatprep.subr.mxu0 %v472
    %856 = vmatpush1.msra.mxu0 %v471
    %857 = vmatprep.subr.mxu0 0.0
    %858 = vmatpush1.msra.mxu0 0.0
    %859 = vmatprep.subr.mxu0 0.0
    %860 = vmatpush1.msra.mxu0 0.0
    %861 = vmatprep.subr.mxu0 0.0
    %862 = vmatpush1.msra.mxu0 0.0
    %863 = vmatprep.subr.mxu0 0.0
    %864 = vmatpush1.msra.mxu0 0.0
    %865 = vmatprep.subr.mxu0 0.0
    %866 = vmatpush1.msra.mxu0 0.0
    %867 = vmatprep.subr.mxu0 0.0
    %868 = vmatpush1.msra.mxu0 0.0
    %869 = vmatprep.subr.mxu0 0.0
    %870 = vmatpush1.msra.mxu0 0.0
    %871 = vmatprep.subr.mxu0 0.0
    %872 = vmatpush1.msra.mxu0 0.0
    %873 = vmatprep.subr.mxu0 0.0
    %874 = vmatpush1.msra.mxu0 0.0
    %875 = vmatprep.subr.mxu0 0.0
    %876 = vmatpush1.msra.mxu0 0.0
    %877 = vmatprep.subr.mxu0 0.0
    %878 = vmatpush1.msra.mxu0 0.0
    %879 = vmatprep.subr.mxu0 0.0
    %880 = vmatpush1.msra.mxu0 0.0
    %881 = vmatprep.subr.mxu0 0.0
    %882 = vmatpush1.msra.mxu0 0.0
    %883 = vmatprep.subr.mxu0 0.0
    %884 = vmatpush1.msra.mxu0 0.0
    %885 = vmatprep.subr.mxu0 0.0
    %886 = vmatpush1.msra.mxu0 0.0
    %887 = vmatprep.subr.mxu0 0.0
    %888 = vmatpush1.msra.mxu0 0.0
    %889 = vmatprep.mubr.f32.mxu0 0.0
    %890 = vmatmul.mubr.f32.gmra.mrb[0].mxu0 %v819
    %v891 = vpop.f32.mrb[0].mxu0
    %v892 = vadd.f32 0.0, %v891
    %v893 = vpop.f32.mrb[0].mxu0
    %v894 = vadd.f32 0.0, %v893
    %895 = vdwg.mxu0
    %896 = vmatprep.subr.mxu0 %v414
    %897 = vmatpush1.msra.mxu0 %v413
    %898 = vmatprep.subr.mxu0 %v418
    %899 = vmatpush1.msra.mxu0 %v417
    %900 = vmatprep.subr.mxu0 %v422
    %901 = vmatpush1.msra.mxu0 %v421
    %902 = vmatprep.subr.mxu0 %v426
    %903 = vmatpush1.msra.mxu0 %v425
    %904 = vmatprep.subr.mxu0 %v430
    %905 = vmatpush1.msra.mxu0 %v429
    %906 = vmatprep.subr.mxu0 %v434
    %907 = vmatpush1.msra.mxu0 %v433
    %908 = vmatprep.subr.mxu0 %v438
    %909 = vmatpush1.msra.mxu0 %v437
    %910 = vmatprep.subr.mxu0 %v442
    %911 = vmatpush1.msra.mxu0 %v441
    %912 = vmatprep.subr.mxu0 %v446
    %913 = vmatpush1.msra.mxu0 %v445
    %914 = vmatprep.subr.mxu0 %v450
    %915 = vmatpush1.msra.mxu0 %v449
    %916 = vmatprep.subr.mxu0 %v454
    %917 = vmatpush1.msra.mxu0 %v453
    %918 = vmatprep.subr.mxu0 %v458
    %919 = vmatpush1.msra.mxu0 %v457
    %920 = vmatprep.subr.mxu0 %v462
    %921 = vmatpush1.msra.mxu0 %v461
    %922 = vmatprep.subr.mxu0 %v466
    %923 = vmatpush1.msra.mxu0 %v465
    %924 = vmatprep.subr.mxu0 %v470
    %925 = vmatpush1.msra.mxu0 %v469
    %926 = vmatprep.subr.mxu0 %v474
    %927 = vmatpush1.msra.mxu0 %v473
    %928 = vmatprep.subr.mxu0 0.0
    %929 = vmatpush1.msra.mxu0 0.0
    %930 = vmatprep.subr.mxu0 0.0
    %931 = vmatpush1.msra.mxu0 0.0
    %932 = vmatprep.subr.mxu0 0.0
    %933 = vmatpush1.msra.mxu0 0.0
    %934 = vmatprep.subr.mxu0 0.0
    %935 = vmatpush1.msra.mxu0 0.0
    %936 = vmatprep.subr.mxu0 0.0
    %937 = vmatpush1.msra.mxu0 0.0
    %938 = vmatprep.subr.mxu0 0.0
    %939 = vmatpush1.msra.mxu0 0.0
    %940 = vmatprep.subr.mxu0 0.0
    %941 = vmatpush1.msra.mxu0 0.0
    %942 = vmatprep.subr.mxu0 0.0
    %943 = vmatpush1.msra.mxu0 0.0
    %944 = vmatprep.subr.mxu0 0.0
    %945 = vmatpush1.msra.mxu0 0.0
    %946 = vmatprep.subr.mxu0 0.0
    %947 = vmatpush1.msra.mxu0 0.0
    %948 = vmatprep.subr.mxu0 0.0
    %949 = vmatpush1.msra.mxu0 0.0
    %950 = vmatprep.subr.mxu0 0.0
    %951 = vmatpush1.msra.mxu0 0.0
    %952 = vmatprep.subr.mxu0 0.0
    %953 = vmatpush1.msra.mxu0 0.0
    %954 = vmatprep.subr.mxu0 0.0
    %955 = vmatpush1.msra.mxu0 0.0
    %956 = vmatprep.subr.mxu0 0.0
    %957 = vmatpush1.msra.mxu0 0.0
    %958 = vmatprep.subr.mxu0 0.0
    %959 = vmatpush1.msra.mxu0 0.0
    %960 = vmatprep.mubr.f32.mxu0 0.0
    %961 = vmatmul.mubr.f32.gmra.mrb[0].mxu0 %v819
    %v962 = vpop.f32.mrb[0].mxu0
    %v963 = vadd.f32 0.0, %v962
    %v964 = vpop.f32.mrb[0].mxu0
    %v965 = vadd.f32 0.0, %v964
    %966 = vdwg.mxu0
    %v967 = vadd.f32 %v821, %v892
    %v968 = vadd.f32 %v822, %v894
    %v969 = vadd.f32 %v823, %v963
    %v970 = vadd.f32 %v824, %v965
    %v971 = vxor.u32 %v967, 2147483648
    %v972 = vmul.f32 %v971, 1.442695
    %v973 = vpow.pop %v972
    %v974 = vadd.f32 %v973, 1.0
    %v975 = vrcp.pop %v974
    %v976 = vmul.f32 1.0, %v975
    %v977 = vxor.u32 %v968, 2147483648
    %v978 = vmul.f32 %v977, 1.442695
    %v979 = vpow.pop %v978
    %v980 = vadd.f32 %v979, 1.0
    %v981 = vrcp.pop %v980
    %v982 = vmul.f32 1.0, %v981
    %v983 = vtanh.pop %v969
    %v984 = vxor.u32 %v970, 2147483648
    %v985 = vmul.f32 %v984, 1.442695
    %v986 = vpow.pop %v985
    %v987 = vadd.f32 %v986, 1.0
    %v988 = vrcp.pop %v987
    %v989 = vmul.f32 1.0, %v988
    %v990 = vmul.f32 %v982, %v817
    %v991 = vmul.f32 %v976, %v983
    %v992 = vadd.f32 %v990, %v991
    %v993 = vtanh.pop %v992
    %v994 = vmul.f32 %v989, %v993
    %s995 = scalar_lea.vmem [#allocation2], 96
    %v996 = vld [vmem:[%s995] sm:$0xff]
    %v997 = vld [vmem:[%s995 + $0x8] sm:$0xff]
    %v998 = vld [vmem:[%s995 + $0x10] sm:$0xff]
    %v999 = vld [vmem:[%s995 + $0x18] sm:$0xff]
    %1000 = vmatprep.subr.mxu0 %v412
    %1001 = vmatpush1.msra.mxu0 %v411
    %1002 = vmatprep.subr.mxu0 %v416
    %1003 = vmatpush1.msra.mxu0 %v415
    %1004 = vmatprep.subr.mxu0 %v420
    %1005 = vmatpush1.msra.mxu0 %v419
    %1006 = vmatprep.subr.mxu0 %v424
    %1007 = vmatpush1.msra.mxu0 %v423
    %1008 = vmatprep.subr.mxu0 %v428
    %1009 = vmatpush1.msra.mxu0 %v427
    %1010 = vmatprep.subr.mxu0 %v432
    %1011 = vmatpush1.msra.mxu0 %v431
    %1012 = vmatprep.subr.mxu0 %v436
    %1013 = vmatpush1.msra.mxu0 %v435
    %1014 = vmatprep.subr.mxu0 %v440
    %1015 = vmatpush1.msra.mxu0 %v439
    %1016 = vmatprep.subr.mxu0 %v444
    %1017 = vmatpush1.msra.mxu0 %v443
    %1018 = vmatprep.subr.mxu0 %v448
    %1019 = vmatpush1.msra.mxu0 %v447
    %1020 = vmatprep.subr.mxu0 %v452
    %1021 = vmatpush1.msra.mxu0 %v451
    %1022 = vmatprep.subr.mxu0 %v456
    %1023 = vmatpush1.msra.mxu0 %v455
    %1024 = vmatprep.subr.mxu0 %v460
    %1025 = vmatpush1.msra.mxu0 %v459
    %1026 = vmatprep.subr.mxu0 %v464
    %1027 = vmatpush1.msra.mxu0 %v463
    %1028 = vmatprep.subr.mxu0 %v468
    %1029 = vmatpush1.msra.mxu0 %v467
    %1030 = vmatprep.subr.mxu0 %v472
    %1031 = vmatpush1.msra.mxu0 %v471
    %1032 = vmatprep.subr.mxu0 0.0
    %1033 = vmatpush1.msra.mxu0 0.0
    %1034 = vmatprep.subr.mxu0 0.0
    %1035 = vmatpush1.msra.mxu0 0.0
    %1036 = vmatprep.subr.mxu0 0.0
    %1037 = vmatpush1.msra.mxu0 0.0
    %1038 = vmatprep.subr.mxu0 0.0
    %1039 = vmatpush1.msra.mxu0 0.0
    %1040 = vmatprep.subr.mxu0 0.0
    %1041 = vmatpush1.msra.mxu0 0.0
    %1042 = vmatprep.subr.mxu0 0.0
    %1043 = vmatpush1.msra.mxu0 0.0
    %1044 = vmatprep.subr.mxu0 0.0
    %1045 = vmatpush1.msra.mxu0 0.0
    %1046 = vmatprep.subr.mxu0 0.0
    %1047 = vmatpush1.msra.mxu0 0.0
    %1048 = vmatprep.subr.mxu0 0.0
    %1049 = vmatpush1.msra.mxu0 0.0
    %1050 = vmatprep.subr.mxu0 0.0
    %1051 = vmatpush1.msra.mxu0 0.0
    %1052 = vmatprep.subr.mxu0 0.0
    %1053 = vmatpush1.msra.mxu0 0.0
    %1054 = vmatprep.subr.mxu0 0.0
    %1055 = vmatpush1.msra.mxu0 0.0
    %1056 = vmatprep.subr.mxu0 0.0
    %1057 = vmatpush1.msra.mxu0 0.0
    %1058 = vmatprep.subr.mxu0 0.0
    %1059 = vmatpush1.msra.mxu0 0.0
    %1060 = vmatprep.subr.mxu0 0.0
    %1061 = vmatpush1.msra.mxu0 0.0
    %1062 = vmatprep.subr.mxu0 0.0
    %1063 = vmatpush1.msra.mxu0 0.0
    %1064 = vmatprep.mubr.f32.mxu0 0.0
    %1065 = vmatmul.mubr.f32.gmra.mrb[0].mxu0 %v994
    %v1066 = vpop.f32.mrb[0].mxu0
    %v1067 = vadd.f32 0.0, %v1066
    %v1068 = vpop.f32.mrb[0].mxu0
    %v1069 = vadd.f32 0.0, %v1068
    %1070 = vdwg.mxu0
    %1071 = vmatprep.subr.mxu0 %v414
    %1072 = vmatpush1.msra.mxu0 %v413
    %1073 = vmatprep.subr.mxu0 %v418
    %1074 = vmatpush1.msra.mxu0 %v417
    %1075 = vmatprep.subr.mxu0 %v422
    %1076 = vmatpush1.msra.mxu0 %v421
    %1077 = vmatprep.subr.mxu0 %v426
    %1078 = vmatpush1.msra.mxu0 %v425
    %1079 = vmatprep.subr.mxu0 %v430
    %1080 = vmatpush1.msra.mxu0 %v429
    %1081 = vmatprep.subr.mxu0 %v434
    %1082 = vmatpush1.msra.mxu0 %v433
    %1083 = vmatprep.subr.mxu0 %v438
    %1084 = vmatpush1.msra.mxu0 %v437
    %1085 = vmatprep.subr.mxu0 %v442
    %1086 = vmatpush1.msra.mxu0 %v441
    %1087 = vmatprep.subr.mxu0 %v446
    %1088 = vmatpush1.msra.mxu0 %v445
    %1089 = vmatprep.subr.mxu0 %v450
    %1090 = vmatpush1.msra.mxu0 %v449
    %1091 = vmatprep.subr.mxu0 %v454
    %1092 = vmatpush1.msra.mxu0 %v453
    %1093 = vmatprep.subr.mxu0 %v458
    %1094 = vmatpush1.msra.mxu0 %v457
    %1095 = vmatprep.subr.mxu0 %v462
    %1096 = vmatpush1.msra.mxu0 %v461
    %1097 = vmatprep.subr.mxu0 %v466
    %1098 = vmatpush1.msra.mxu0 %v465
    %1099 = vmatprep.subr.mxu0 %v470
    %1100 = vmatpush1.msra.mxu0 %v469
    %1101 = vmatprep.subr.mxu0 %v474
    %1102 = vmatpush1.msra.mxu0 %v473
    %1103 = vmatprep.subr.mxu0 0.0
    %1104 = vmatpush1.msra.mxu0 0.0
    %1105 = vmatprep.subr.mxu0 0.0
    %1106 = vmatpush1.msra.mxu0 0.0
    %1107 = vmatprep.subr.mxu0 0.0
    %1108 = vmatpush1.msra.mxu0 0.0
    %1109 = vmatprep.subr.mxu0 0.0
    %1110 = vmatpush1.msra.mxu0 0.0
    %1111 = vmatprep.subr.mxu0 0.0
    %1112 = vmatpush1.msra.mxu0 0.0
    %1113 = vmatprep.subr.mxu0 0.0
    %1114 = vmatpush1.msra.mxu0 0.0
    %1115 = vmatprep.subr.mxu0 0.0
    %1116 = vmatpush1.msra.mxu0 0.0
    %1117 = vmatprep.subr.mxu0 0.0
    %1118 = vmatpush1.msra.mxu0 0.0
    %1119 = vmatprep.subr.mxu0 0.0
    %1120 = vmatpush1.msra.mxu0 0.0
    %1121 = vmatprep.subr.mxu0 0.0
    %1122 = vmatpush1.msra.mxu0 0.0
    %1123 = vmatprep.subr.mxu0 0.0
    %1124 = vmatpush1.msra.mxu0 0.0
    %1125 = vmatprep.subr.mxu0 0.0
    %1126 = vmatpush1.msra.mxu0 0.0
    %1127 = vmatprep.subr.mxu0 0.0
    %1128 = vmatpush1.msra.mxu0 0.0
    %1129 = vmatprep.subr.mxu0 0.0
    %1130 = vmatpush1.msra.mxu0 0.0
    %1131 = vmatprep.subr.mxu0 0.0
    %1132 = vmatpush1.msra.mxu0 0.0
    %1133 = vmatprep.subr.mxu0 0.0
    %1134 = vmatpush1.msra.mxu0 0.0
    %1135 = vmatprep.mubr.f32.mxu0 0.0
    %1136 = vmatmul.mubr.f32.gmra.mrb[0].mxu0 %v994
    %v1137 = vpop.f32.mrb[0].mxu0
    %v1138 = vadd.f32 0.0, %v1137
    %v1139 = vpop.f32.mrb[0].mxu0
    %v1140 = vadd.f32 0.0, %v1139
    %1141 = vdwg.mxu0
    %v1142 = vadd.f32 %v996, %v1067
    %v1143 = vadd.f32 %v997, %v1069
    %v1144 = vadd.f32 %v998, %v1138
    %v1145 = vadd.f32 %v999, %v1140
    %v1146 = vxor.u32 %v1142, 2147483648
    %v1147 = vmul.f32 %v1146, 1.442695
    %v1148 = vpow.pop %v1147
    %v1149 = vadd.f32 %v1148, 1.0
    %v1150 = vrcp.pop %v1149
    %v1151 = vmul.f32 1.0, %v1150
    %v1152 = vxor.u32 %v1143, 2147483648
    %v1153 = vmul.f32 %v1152, 1.442695
    %v1154 = vpow.pop %v1153
    %v1155 = vadd.f32 %v1154, 1.0
    %v1156 = vrcp.pop %v1155
    %v1157 = vmul.f32 1.0, %v1156
    %v1158 = vtanh.pop %v1144
    %v1159 = vxor.u32 %v1145, 2147483648
    %v1160 = vmul.f32 %v1159, 1.442695
    %v1161 = vpow.pop %v1160
    %v1162 = vadd.f32 %v1161, 1.0
    %v1163 = vrcp.pop %v1162
    %v1164 = vmul.f32 1.0, %v1163
    %v1165 = vmul.f32 %v1157, %v992
    %v1166 = vmul.f32 %v1151, %v1158
    %v1167 = vadd.f32 %v1165, %v1166
    %v1168 = vtanh.pop %v1167
    %v1169 = vmul.f32 %v1164, %v1168
    %s1170 = scalar_lea.vmem [#allocation2], 128
    %v1171 = vld [vmem:[%s1170] sm:$0xff]
    %v1172 = vld [vmem:[%s1170 + $0x8] sm:$0xff]
    %v1173 = vld [vmem:[%s1170 + $0x10] sm:$0xff]
    %v1174 = vld [vmem:[%s1170 + $0x18] sm:$0xff]
    %1175 = vmatprep.subr.mxu0 %v412
    %1176 = vmatpush1.msra.mxu0 %v411
    %1177 = vmatprep.subr.mxu0 %v416
    %1178 = vmatpush1.msra.mxu0 %v415
    %1179 = vmatprep.subr.mxu0 %v420
    %1180 = vmatpush1.msra.mxu0 %v419
    %1181 = vmatprep.subr.mxu0 %v424
    %1182 = vmatpush1.msra.mxu0 %v423
    %1183 = vmatprep.subr.mxu0 %v428
    %1184 = vmatpush1.msra.mxu0 %v427
    %1185 = vmatprep.subr.mxu0 %v432
    %1186 = vmatpush1.msra.mxu0 %v431
    %1187 = vmatprep.subr.mxu0 %v436
    %1188 = vmatpush1.msra.mxu0 %v435
    %1189 = vmatprep.subr.mxu0 %v440
    %1190 = vmatpush1.msra.mxu0 %v439
    %1191 = vmatprep.subr.mxu0 %v444
    %1192 = vmatpush1.msra.mxu0 %v443
    %1193 = vmatprep.subr.mxu0 %v448
    %1194 = vmatpush1.msra.mxu0 %v447
    %1195 = vmatprep.subr.mxu0 %v452
    %1196 = vmatpush1.msra.mxu0 %v451
    %1197 = vmatprep.subr.mxu0 %v456
    %1198 = vmatpush1.msra.mxu0 %v455
    %1199 = vmatprep.subr.mxu0 %v460
    %1200 = vmatpush1.msra.mxu0 %v459
    %1201 = vmatprep.subr.mxu0 %v464
    %1202 = vmatpush1.msra.mxu0 %v463
    %1203 = vmatprep.subr.mxu0 %v468
    %1204 = vmatpush1.msra.mxu0 %v467
    %1205 = vmatprep.subr.mxu0 %v472
    %1206 = vmatpush1.msra.mxu0 %v471
    %1207 = vmatprep.subr.mxu0 0.0
    %1208 = vmatpush1.msra.mxu0 0.0
    %1209 = vmatprep.subr.mxu0 0.0
    %1210 = vmatpush1.msra.mxu0 0.0
    %1211 = vmatprep.subr.mxu0 0.0
    %1212 = vmatpush1.msra.mxu0 0.0
    %1213 = vmatprep.subr.mxu0 0.0
    %1214 = vmatpush1.msra.mxu0 0.0
    %1215 = vmatprep.subr.mxu0 0.0
    %1216 = vmatpush1.msra.mxu0 0.0
    %1217 = vmatprep.subr.mxu0 0.0
    %1218 = vmatpush1.msra.mxu0 0.0
    %1219 = vmatprep.subr.mxu0 0.0
    %1220 = vmatpush1.msra.mxu0 0.0
    %1221 = vmatprep.subr.mxu0 0.0
    %1222 = vmatpush1.msra.mxu0 0.0
    %1223 = vmatprep.subr.mxu0 0.0
    %1224 = vmatpush1.msra.mxu0 0.0
    %1225 = vmatprep.subr.mxu0 0.0
    %1226 = vmatpush1.msra.mxu0 0.0
    %1227 = vmatprep.subr.mxu0 0.0
    %1228 = vmatpush1.msra.mxu0 0.0
    %1229 = vmatprep.subr.mxu0 0.0
    %1230 = vmatpush1.msra.mxu0 0.0
    %1231 = vmatprep.subr.mxu0 0.0
    %1232 = vmatpush1.msra.mxu0 0.0
    %1233 = vmatprep.subr.mxu0 0.0
    %1234 = vmatpush1.msra.mxu0 0.0
    %1235 = vmatprep.subr.mxu0 0.0
    %1236 = vmatpush1.msra.mxu0 0.0
    %1237 = vmatprep.subr.mxu0 0.0
    %1238 = vmatpush1.msra.mxu0 0.0
    %1239 = vmatprep.mubr.f32.mxu0 0.0
    %1240 = vmatmul.mubr.f32.gmra.mrb[0].mxu0 %v1169
    %v1241 = vpop.f32.mrb[0].mxu0
    %v1242 = vadd.f32 0.0, %v1241
    %v1243 = vpop.f32.mrb[0].mxu0
    %v1244 = vadd.f32 0.0, %v1243
    %1245 = vdwg.mxu0
    %1246 = vmatprep.subr.mxu0 %v414
    %1247 = vmatpush1.msra.mxu0 %v413
    %1248 = vmatprep.subr.mxu0 %v418
    %1249 = vmatpush1.msra.mxu0 %v417
    %1250 = vmatprep.subr.mxu0 %v422
    %1251 = vmatpush1.msra.mxu0 %v421
    %1252 = vmatprep.subr.mxu0 %v426
    %1253 = vmatpush1.msra.mxu0 %v425
    %1254 = vmatprep.subr.mxu0 %v430
    %1255 = vmatpush1.msra.mxu0 %v429
    %1256 = vmatprep.subr.mxu0 %v434
    %1257 = vmatpush1.msra.mxu0 %v433
    %1258 = vmatprep.subr.mxu0 %v438
    %1259 = vmatpush1.msra.mxu0 %v437
    %1260 = vmatprep.subr.mxu0 %v442
    %1261 = vmatpush1.msra.mxu0 %v441
    %1262 = vmatprep.subr.mxu0 %v446
    %1263 = vmatpush1.msra.mxu0 %v445
    %1264 = vmatprep.subr.mxu0 %v450
    %1265 = vmatpush1.msra.mxu0 %v449
    %1266 = vmatprep.subr.mxu0 %v454
    %1267 = vmatpush1.msra.mxu0 %v453
    %1268 = vmatprep.subr.mxu0 %v458
    %1269 = vmatpush1.msra.mxu0 %v457
    %1270 = vmatprep.subr.mxu0 %v462
    %1271 = vmatpush1.msra.mxu0 %v461
    %1272 = vmatprep.subr.mxu0 %v466
    %1273 = vmatpush1.msra.mxu0 %v465
    %1274 = vmatprep.subr.mxu0 %v470
    %1275 = vmatpush1.msra.mxu0 %v469
    %1276 = vmatprep.subr.mxu0 %v474
    %1277 = vmatpush1.msra.mxu0 %v473
    %1278 = vmatprep.subr.mxu0 0.0
    %1279 = vmatpush1.msra.mxu0 0.0
    %1280 = vmatprep.subr.mxu0 0.0
    %1281 = vmatpush1.msra.mxu0 0.0
    %1282 = vmatprep.subr.mxu0 0.0
    %1283 = vmatpush1.msra.mxu0 0.0
    %1284 = vmatprep.subr.mxu0 0.0
    %1285 = vmatpush1.msra.mxu0 0.0
    %1286 = vmatprep.subr.mxu0 0.0
    %1287 = vmatpush1.msra.mxu0 0.0
    %1288 = vmatprep.subr.mxu0 0.0
    %1289 = vmatpush1.msra.mxu0 0.0
    %1290 = vmatprep.subr.mxu0 0.0
    %1291 = vmatpush1.msra.mxu0 0.0
    %1292 = vmatprep.subr.mxu0 0.0
    %1293 = vmatpush1.msra.mxu0 0.0
    %1294 = vmatprep.subr.mxu0 0.0
    %1295 = vmatpush1.msra.mxu0 0.0
    %1296 = vmatprep.subr.mxu0 0.0
    %1297 = vmatpush1.msra.mxu0 0.0
    %1298 = vmatprep.subr.mxu0 0.0
    %1299 = vmatpush1.msra.mxu0 0.0
    %1300 = vmatprep.subr.mxu0 0.0
    %1301 = vmatpush1.msra.mxu0 0.0
    %1302 = vmatprep.subr.mxu0 0.0
    %1303 = vmatpush1.msra.mxu0 0.0
    %1304 = vmatprep.subr.mxu0 0.0
    %1305 = vmatpush1.msra.mxu0 0.0
    %1306 = vmatprep.subr.mxu0 0.0
    %1307 = vmatpush1.msra.mxu0 0.0
    %1308 = vmatprep.subr.mxu0 0.0
    %1309 = vmatpush1.msra.mxu0 0.0
    %1310 = vmatprep.mubr.f32.mxu0 0.0
    %1311 = vmatmul.mubr.f32.gmra.mrb[0].mxu0 %v1169
    %v1312 = vpop.f32.mrb[0].mxu0
    %v1313 = vadd.f32 0.0, %v1312
    %v1314 = vpop.f32.mrb[0].mxu0
    %v1315 = vadd.f32 0.0, %v1314
    %1316 = vdwg.mxu0
    %v1317 = vadd.f32 %v1171, %v1242
    %v1318 = vadd.f32 %v1172, %v1244
    %v1319 = vadd.f32 %v1173, %v1313
    %v1320 = vadd.f32 %v1174, %v1315
    %v1321 = vxor.u32 %v1317, 2147483648
    %v1322 = vmul.f32 %v1321, 1.442695
    %v1323 = vpow.pop %v1322
    %v1324 = vadd.f32 %v1323, 1.0
    %v1325 = vrcp.pop %v1324
    %v1326 = vmul.f32 1.0, %v1325
    %v1327 = vxor.u32 %v1318, 2147483648
    %v1328 = vmul.f32 %v1327, 1.442695
    %v1329 = vpow.pop %v1328
    %v1330 = vadd.f32 %v1329, 1.0
    %v1331 = vrcp.pop %v1330
    %v1332 = vmul.f32 1.0, %v1331
    %v1333 = vtanh.pop %v1319
    %v1334 = vxor.u32 %v1320, 2147483648
    %v1335 = vmul.f32 %v1334, 1.442695
    %v1336 = vpow.pop %v1335
    %v1337 = vadd.f32 %v1336, 1.0
    %v1338 = vrcp.pop %v1337
    %v1339 = vmul.f32 1.0, %v1338
    %v1340 = vmul.f32 %v1332, %v1167
    %v1341 = vmul.f32 %v1326, %v1333
    %v1342 = vadd.f32 %v1340, %v1341
    %v1343 = vtanh.pop %v1342
    %v1344 = vmul.f32 %v1339, %v1343
    %s1345 = scalar_lea.vmem [#allocation2], 160
    %v1346 = vld [vmem:[%s1345] sm:$0xff]
    %v1347 = vld [vmem:[%s1345 + $0x8] sm:$0xff]
    %v1348 = vld [vmem:[%s1345 + $0x10] sm:$0xff]
    %v1349 = vld [vmem:[%s1345 + $0x18] sm:$0xff]
    %1350 = vmatprep.subr.mxu0 %v412
    %1351 = vmatpush1.msra.mxu0 %v411
    %1352 = vmatprep.subr.mxu0 %v416
    %1353 = vmatpush1.msra.mxu0 %v415
    %1354 = vmatprep.subr.mxu0 %v420
    %1355 = vmatpush1.msra.mxu0 %v419
    %1356 = vmatprep.subr.mxu0 %v424
    %1357 = vmatpush1.msra.mxu0 %v423
    %1358 = vmatprep.subr.mxu0 %v428
    %1359 = vmatpush1.msra.mxu0 %v427
    %1360 = vmatprep.subr.mxu0 %v432
    %1361 = vmatpush1.msra.mxu0 %v431
    %1362 = vmatprep.subr.mxu0 %v436
    %1363 = vmatpush1.msra.mxu0 %v435
    %1364 = vmatprep.subr.mxu0 %v440
    %1365 = vmatpush1.msra.mxu0 %v439
    %1366 = vmatprep.subr.mxu0 %v444
    %1367 = vmatpush1.msra.mxu0 %v443
    %1368 = vmatprep.subr.mxu0 %v448
    %1369 = vmatpush1.msra.mxu0 %v447
    %1370 = vmatprep.subr.mxu0 %v452
    %1371 = vmatpush1.msra.mxu0 %v451
    %1372 = vmatprep.subr.mxu0 %v456
    %1373 = vmatpush1.msra.mxu0 %v455
    %1374 = vmatprep.subr.mxu0 %v460
    %1375 = vmatpush1.msra.mxu0 %v459
    %1376 = vmatprep.subr.mxu0 %v464
    %1377 = vmatpush1.msra.mxu0 %v463
    %1378 = vmatprep.subr.mxu0 %v468
    %1379 = vmatpush1.msra.mxu0 %v467
    %1380 = vmatprep.subr.mxu0 %v472
    %1381 = vmatpush1.msra.mxu0 %v471
    %1382 = vmatprep.subr.mxu0 0.0
    %1383 = vmatpush1.msra.mxu0 0.0
    %1384 = vmatprep.subr.mxu0 0.0
    %1385 = vmatpush1.msra.mxu0 0.0
    %1386 = vmatprep.subr.mxu0 0.0
    %1387 = vmatpush1.msra.mxu0 0.0
    %1388 = vmatprep.subr.mxu0 0.0
    %1389 = vmatpush1.msra.mxu0 0.0
    %1390 = vmatprep.subr.mxu0 0.0
    %1391 = vmatpush1.msra.mxu0 0.0
    %1392 = vmatprep.subr.mxu0 0.0
    %1393 = vmatpush1.msra.mxu0 0.0
    %1394 = vmatprep.subr.mxu0 0.0
    %1395 = vmatpush1.msra.mxu0 0.0
    %1396 = vmatprep.subr.mxu0 0.0
    %1397 = vmatpush1.msra.mxu0 0.0
    %1398 = vmatprep.subr.mxu0 0.0
    %1399 = vmatpush1.msra.mxu0 0.0
    %1400 = vmatprep.subr.mxu0 0.0
    %1401 = vmatpush1.msra.mxu0 0.0
    %1402 = vmatprep.subr.mxu0 0.0
    %1403 = vmatpush1.msra.mxu0 0.0
    %1404 = vmatprep.subr.mxu0 0.0
    %1405 = vmatpush1.msra.mxu0 0.0
    %1406 = vmatprep.subr.mxu0 0.0
    %1407 = vmatpush1.msra.mxu0 0.0
    %1408 = vmatprep.subr.mxu0 0.0
    %1409 = vmatpush1.msra.mxu0 0.0
    %1410 = vmatprep.subr.mxu0 0.0
    %1411 = vmatpush1.msra.mxu0 0.0
    %1412 = vmatprep.subr.mxu0 0.0
    %1413 = vmatpush1.msra.mxu0 0.0
    %1414 = vmatprep.mubr.f32.mxu0 0.0
    %1415 = vmatmul.mubr.f32.gmra.mrb[0].mxu0 %v1344
    %v1416 = vpop.f32.mrb[0].mxu0
    %v1417 = vadd.f32 0.0, %v1416
    %v1418 = vpop.f32.mrb[0].mxu0
    %v1419 = vadd.f32 0.0, %v1418
    %1420 = vdwg.mxu0
    %1421 = vmatprep.subr.mxu0 %v414
    %1422 = vmatpush1.msra.mxu0 %v413
    %1423 = vmatprep.subr.mxu0 %v418
    %1424 = vmatpush1.msra.mxu0 %v417
    %1425 = vmatprep.subr.mxu0 %v422
    %1426 = vmatpush1.msra.mxu0 %v421
    %1427 = vmatprep.subr.mxu0 %v426
    %1428 = vmatpush1.msra.mxu0 %v425
    %1429 = vmatprep.subr.mxu0 %v430
    %1430 = vmatpush1.msra.mxu0 %v429
    %1431 = vmatprep.subr.mxu0 %v434
    %1432 = vmatpush1.msra.mxu0 %v433
    %1433 = vmatprep.subr.mxu0 %v438
    %1434 = vmatpush1.msra.mxu0 %v437
    %1435 = vmatprep.subr.mxu0 %v442
    %1436 = vmatpush1.msra.mxu0 %v441
    %1437 = vmatprep.subr.mxu0 %v446
    %1438 = vmatpush1.msra.mxu0 %v445
    %1439 = vmatprep.subr.mxu0 %v450
    %1440 = vmatpush1.msra.mxu0 %v449
    %1441 = vmatprep.subr.mxu0 %v454
    %1442 = vmatpush1.msra.mxu0 %v453
    %1443 = vmatprep.subr.mxu0 %v458
    %1444 = vmatpush1.msra.mxu0 %v457
    %1445 = vmatprep.subr.mxu0 %v462
    %1446 = vmatpush1.msra.mxu0 %v461
    %1447 = vmatprep.subr.mxu0 %v466
    %1448 = vmatpush1.msra.mxu0 %v465
    %1449 = vmatprep.subr.mxu0 %v470
    %1450 = vmatpush1.msra.mxu0 %v469
    %1451 = vmatprep.subr.mxu0 %v474
    %1452 = vmatpush1.msra.mxu0 %v473
    %1453 = vmatprep.subr.mxu0 0.0
    %1454 = vmatpush1.msra.mxu0 0.0
    %1455 = vmatprep.subr.mxu0 0.0
    %1456 = vmatpush1.msra.mxu0 0.0
    %1457 = vmatprep.subr.mxu0 0.0
    %1458 = vmatpush1.msra.mxu0 0.0
    %1459 = vmatprep.subr.mxu0 0.0
    %1460 = vmatpush1.msra.mxu0 0.0
    %1461 = vmatprep.subr.mxu0 0.0
    %1462 = vmatpush1.msra.mxu0 0.0
    %1463 = vmatprep.subr.mxu0 0.0
    %1464 = vmatpush1.msra.mxu0 0.0
    %1465 = vmatprep.subr.mxu0 0.0
    %1466 = vmatpush1.msra.mxu0 0.0
    %1467 = vmatprep.subr.mxu0 0.0
    %1468 = vmatpush1.msra.mxu0 0.0
    %1469 = vmatprep.subr.mxu0 0.0
    %1470 = vmatpush1.msra.mxu0 0.0
    %1471 = vmatprep.subr.mxu0 0.0
    %1472 = vmatpush1.msra.mxu0 0.0
    %1473 = vmatprep.subr.mxu0 0.0
    %1474 = vmatpush1.msra.mxu0 0.0
    %1475 = vmatprep.subr.mxu0 0.0
    %1476 = vmatpush1.msra.mxu0 0.0
    %1477 = vmatprep.subr.mxu0 0.0
    %1478 = vmatpush1.msra.mxu0 0.0
    %1479 = vmatprep.subr.mxu0 0.0
    %1480 = vmatpush1.msra.mxu0 0.0
    %1481 = vmatprep.subr.mxu0 0.0
    %1482 = vmatpush1.msra.mxu0 0.0
    %1483 = vmatprep.subr.mxu0 0.0
    %1484 = vmatpush1.msra.mxu0 0.0
    %1485 = vmatprep.mubr.f32.mxu0 0.0
    %1486 = vmatmul.mubr.f32.gmra.mrb[0].mxu0 %v1344
    %v1487 = vpop.f32.mrb[0].mxu0
    %v1488 = vadd.f32 0.0, %v1487
    %v1489 = vpop.f32.mrb[0].mxu0
    %v1490 = vadd.f32 0.0, %v1489
    %1491 = vdwg.mxu0
    %v1492 = vadd.f32 %v1346, %v1417
    %v1493 = vadd.f32 %v1347, %v1419
    %v1494 = vadd.f32 %v1348, %v1488
    %v1495 = vadd.f32 %v1349, %v1490
    %v1496 = vxor.u32 %v1492, 2147483648
    %v1497 = vmul.f32 %v1496, 1.442695
    %v1498 = vpow.pop %v1497
    %v1499 = vadd.f32 %v1498, 1.0
    %v1500 = vrcp.pop %v1499
    %v1501 = vmul.f32 1.0, %v1500
    %v1502 = vxor.u32 %v1493, 2147483648
    %v1503 = vmul.f32 %v1502, 1.442695
    %v1504 = vpow.pop %v1503
    %v1505 = vadd.f32 %v1504, 1.0
    %v1506 = vrcp.pop %v1505
    %v1507 = vmul.f32 1.0, %v1506
    %v1508 = vtanh.pop %v1494
    %v1509 = vxor.u32 %v1495, 2147483648
    %v1510 = vmul.f32 %v1509, 1.442695
    %v1511 = vpow.pop %v1510
    %v1512 = vadd.f32 %v1511, 1.0
    %v1513 = vrcp.pop %v1512
    %v1514 = vmul.f32 1.0, %v1513
    %v1515 = vmul.f32 %v1507, %v1342
    %v1516 = vmul.f32 %v1501, %v1508
    %v1517 = vadd.f32 %v1515, %v1516
    %v1518 = vtanh.pop %v1517
    %v1519 = vmul.f32 %v1514, %v1518
    %s1520 = scalar_lea.vmem [#allocation2], 192
    %v1521 = vld [vmem:[%s1520] sm:$0xff]
    %v1522 = vld [vmem:[%s1520 + $0x8] sm:$0xff]
    %v1523 = vld [vmem:[%s1520 + $0x10] sm:$0xff]
    %v1524 = vld [vmem:[%s1520 + $0x18] sm:$0xff]
    %1525 = vmatprep.subr.mxu0 %v412
    %1526 = vmatpush1.msra.mxu0 %v411
    %1527 = vmatprep.subr.mxu0 %v416
    %1528 = vmatpush1.msra.mxu0 %v415
    %1529 = vmatprep.subr.mxu0 %v420
    %1530 = vmatpush1.msra.mxu0 %v419
    %1531 = vmatprep.subr.mxu0 %v424
    %1532 = vmatpush1.msra.mxu0 %v423
    %1533 = vmatprep.subr.mxu0 %v428
    %1534 = vmatpush1.msra.mxu0 %v427
    %1535 = vmatprep.subr.mxu0 %v432
    %1536 = vmatpush1.msra.mxu0 %v431
    %1537 = vmatprep.subr.mxu0 %v436
    %1538 = vmatpush1.msra.mxu0 %v435
    %1539 = vmatprep.subr.mxu0 %v440
    %1540 = vmatpush1.msra.mxu0 %v439
    %1541 = vmatprep.subr.mxu0 %v444
    %1542 = vmatpush1.msra.mxu0 %v443
    %1543 = vmatprep.subr.mxu0 %v448
    %1544 = vmatpush1.msra.mxu0 %v447
    %1545 = vmatprep.subr.mxu0 %v452
    %1546 = vmatpush1.msra.mxu0 %v451
    %1547 = vmatprep.subr.mxu0 %v456
    %1548 = vmatpush1.msra.mxu0 %v455
    %1549 = vmatprep.subr.mxu0 %v460
    %1550 = vmatpush1.msra.mxu0 %v459
    %1551 = vmatprep.subr.mxu0 %v464
    %1552 = vmatpush1.msra.mxu0 %v463
    %1553 = vmatprep.subr.mxu0 %v468
    %1554 = vmatpush1.msra.mxu0 %v467
    %1555 = vmatprep.subr.mxu0 %v472
    %1556 = vmatpush1.msra.mxu0 %v471
    %1557 = vmatprep.subr.mxu0 0.0
    %1558 = vmatpush1.msra.mxu0 0.0
    %1559 = vmatprep.subr.mxu0 0.0
    %1560 = vmatpush1.msra.mxu0 0.0
    %1561 = vmatprep.subr.mxu0 0.0
    %1562 = vmatpush1.msra.mxu0 0.0
    %1563 = vmatprep.subr.mxu0 0.0
    %1564 = vmatpush1.msra.mxu0 0.0
    %1565 = vmatprep.subr.mxu0 0.0
    %1566 = vmatpush1.msra.mxu0 0.0
    %1567 = vmatprep.subr.mxu0 0.0
    %1568 = vmatpush1.msra.mxu0 0.0
    %1569 = vmatprep.subr.mxu0 0.0
    %1570 = vmatpush1.msra.mxu0 0.0
    %1571 = vmatprep.subr.mxu0 0.0
    %1572 = vmatpush1.msra.mxu0 0.0
    %1573 = vmatprep.subr.mxu0 0.0
    %1574 = vmatpush1.msra.mxu0 0.0
    %1575 = vmatprep.subr.mxu0 0.0
    %1576 = vmatpush1.msra.mxu0 0.0
    %1577 = vmatprep.subr.mxu0 0.0
    %1578 = vmatpush1.msra.mxu0 0.0
    %1579 = vmatprep.subr.mxu0 0.0
    %1580 = vmatpush1.msra.mxu0 0.0
    %1581 = vmatprep.subr.mxu0 0.0
    %1582 = vmatpush1.msra.mxu0 0.0
    %1583 = vmatprep.subr.mxu0 0.0
    %1584 = vmatpush1.msra.mxu0 0.0
    %1585 = vmatprep.subr.mxu0 0.0
    %1586 = vmatpush1.msra.mxu0 0.0
    %1587 = vmatprep.subr.mxu0 0.0
    %1588 = vmatpush1.msra.mxu0 0.0
    %1589 = vmatprep.mubr.f32.mxu0 0.0
    %1590 = vmatmul.mubr.f32.gmra.mrb[0].mxu0 %v1519
    %v1591 = vpop.f32.mrb[0].mxu0
    %v1592 = vadd.f32 0.0, %v1591
    %v1593 = vpop.f32.mrb[0].mxu0
    %v1594 = vadd.f32 0.0, %v1593
    %1595 = vdwg.mxu0
    %1596 = vmatprep.subr.mxu0 %v414
    %1597 = vmatpush1.msra.mxu0 %v413
    %1598 = vmatprep.subr.mxu0 %v418
    %1599 = vmatpush1.msra.mxu0 %v417
    %1600 = vmatprep.subr.mxu0 %v422
    %1601 = vmatpush1.msra.mxu0 %v421
    %1602 = vmatprep.subr.mxu0 %v426
    %1603 = vmatpush1.msra.mxu0 %v425
    %1604 = vmatprep.subr.mxu0 %v430
    %1605 = vmatpush1.msra.mxu0 %v429
    %1606 = vmatprep.subr.mxu0 %v434
    %1607 = vmatpush1.msra.mxu0 %v433
    %1608 = vmatprep.subr.mxu0 %v438
    %1609 = vmatpush1.msra.mxu0 %v437
    %1610 = vmatprep.subr.mxu0 %v442
    %1611 = vmatpush1.msra.mxu0 %v441
    %1612 = vmatprep.subr.mxu0 %v446
    %1613 = vmatpush1.msra.mxu0 %v445
    %1614 = vmatprep.subr.mxu0 %v450
    %1615 = vmatpush1.msra.mxu0 %v449
    %1616 = vmatprep.subr.mxu0 %v454
    %1617 = vmatpush1.msra.mxu0 %v453
    %1618 = vmatprep.subr.mxu0 %v458
    %1619 = vmatpush1.msra.mxu0 %v457
    %1620 = vmatprep.subr.mxu0 %v462
    %1621 = vmatpush1.msra.mxu0 %v461
    %1622 = vmatprep.subr.mxu0 %v466
    %1623 = vmatpush1.msra.mxu0 %v465
    %1624 = vmatprep.subr.mxu0 %v470
    %1625 = vmatpush1.msra.mxu0 %v469
    %1626 = vmatprep.subr.mxu0 %v474
    %1627 = vmatpush1.msra.mxu0 %v473
    %1628 = vmatprep.subr.mxu0 0.0
    %1629 = vmatpush1.msra.mxu0 0.0
    %1630 = vmatprep.subr.mxu0 0.0
    %1631 = vmatpush1.msra.mxu0 0.0
    %1632 = vmatprep.subr.mxu0 0.0
    %1633 = vmatpush1.msra.mxu0 0.0
    %1634 = vmatprep.subr.mxu0 0.0
    %1635 = vmatpush1.msra.mxu0 0.0
    %1636 = vmatprep.subr.mxu0 0.0
    %1637 = vmatpush1.msra.mxu0 0.0
    %1638 = vmatprep.subr.mxu0 0.0
    %1639 = vmatpush1.msra.mxu0 0.0
    %1640 = vmatprep.subr.mxu0 0.0
    %1641 = vmatpush1.msra.mxu0 0.0
    %1642 = vmatprep.subr.mxu0 0.0
    %1643 = vmatpush1.msra.mxu0 0.0
    %1644 = vmatprep.subr.mxu0 0.0
    %1645 = vmatpush1.msra.mxu0 0.0
    %1646 = vmatprep.subr.mxu0 0.0
    %1647 = vmatpush1.msra.mxu0 0.0
    %1648 = vmatprep.subr.mxu0 0.0
    %1649 = vmatpush1.msra.mxu0 0.0
    %1650 = vmatprep.subr.mxu0 0.0
    %1651 = vmatpush1.msra.mxu0 0.0
    %1652 = vmatprep.subr.mxu0 0.0
    %1653 = vmatpush1.msra.mxu0 0.0
    %1654 = vmatprep.subr.mxu0 0.0
    %1655 = vmatpush1.msra.mxu0 0.0
    %1656 = vmatprep.subr.mxu0 0.0
    %1657 = vmatpush1.msra.mxu0 0.0
    %1658 = vmatprep.subr.mxu0 0.0
    %1659 = vmatpush1.msra.mxu0 0.0
    %1660 = vmatprep.mubr.f32.mxu0 0.0
    %1661 = vmatmul.mubr.f32.gmra.mrb[0].mxu0 %v1519
    %v1662 = vpop.f32.mrb[0].mxu0
    %v1663 = vadd.f32 0.0, %v1662
    %v1664 = vpop.f32.mrb[0].mxu0
    %v1665 = vadd.f32 0.0, %v1664
    %1666 = vdwg.mxu0
    %v1667 = vadd.f32 %v1521, %v1592
    %v1668 = vadd.f32 %v1522, %v1594
    %v1669 = vadd.f32 %v1523, %v1663
    %v1670 = vadd.f32 %v1524, %v1665
    %v1671 = vxor.u32 %v1667, 2147483648
    %v1672 = vmul.f32 %v1671, 1.442695
    %v1673 = vpow.pop %v1672
    %v1674 = vadd.f32 %v1673, 1.0
    %v1675 = vrcp.pop %v1674
    %v1676 = vmul.f32 1.0, %v1675
    %v1677 = vxor.u32 %v1668, 2147483648
    %v1678 = vmul.f32 %v1677, 1.442695
    %v1679 = vpow.pop %v1678
    %v1680 = vadd.f32 %v1679, 1.0
    %v1681 = vrcp.pop %v1680
    %v1682 = vmul.f32 1.0, %v1681
    %v1683 = vtanh.pop %v1669
    %v1684 = vxor.u32 %v1670, 2147483648
    %v1685 = vmul.f32 %v1684, 1.442695
    %v1686 = vpow.pop %v1685
    %v1687 = vadd.f32 %v1686, 1.0
    %v1688 = vrcp.pop %v1687
    %v1689 = vmul.f32 1.0, %v1688
    %v1690 = vmul.f32 %v1682, %v1517
    %v1691 = vmul.f32 %v1676, %v1683
    %v1692 = vadd.f32 %v1690, %v1691
    %v1693 = vtanh.pop %v1692
    %v1694 = vmul.f32 %v1689, %v1693
    %s1695 = scalar_lea.vmem [#allocation2], 224
    %v1696 = vld [vmem:[%s1695] sm:$0xff]
    %v1697 = vld [vmem:[%s1695 + $0x8] sm:$0xff]
    %v1698 = vld [vmem:[%s1695 + $0x10] sm:$0xff]
    %v1699 = vld [vmem:[%s1695 + $0x18] sm:$0xff]
    %1700 = vmatprep.subr.mxu0 %v412
    %1701 = vmatpush1.msra.mxu0 %v411
    %1702 = vmatprep.subr.mxu0 %v416
    %1703 = vmatpush1.msra.mxu0 %v415
    %1704 = vmatprep.subr.mxu0 %v420
    %1705 = vmatpush1.msra.mxu0 %v419
    %1706 = vmatprep.subr.mxu0 %v424
    %1707 = vmatpush1.msra.mxu0 %v423
    %1708 = vmatprep.subr.mxu0 %v428
    %1709 = vmatpush1.msra.mxu0 %v427
    %1710 = vmatprep.subr.mxu0 %v432
    %1711 = vmatpush1.msra.mxu0 %v431
    %1712 = vmatprep.subr.mxu0 %v436
    %1713 = vmatpush1.msra.mxu0 %v435
    %1714 = vmatprep.subr.mxu0 %v440
    %1715 = vmatpush1.msra.mxu0 %v439
    %1716 = vmatprep.subr.mxu0 %v444
    %1717 = vmatpush1.msra.mxu0 %v443
    %1718 = vmatprep.subr.mxu0 %v448
    %1719 = vmatpush1.msra.mxu0 %v447
    %1720 = vmatprep.subr.mxu0 %v452
    %1721 = vmatpush1.msra.mxu0 %v451
    %1722 = vmatprep.subr.mxu0 %v456
    %1723 = vmatpush1.msra.mxu0 %v455
    %1724 = vmatprep.subr.mxu0 %v460
    %1725 = vmatpush1.msra.mxu0 %v459
    %1726 = vmatprep.subr.mxu0 %v464
    %1727 = vmatpush1.msra.mxu0 %v463
    %1728 = vmatprep.subr.mxu0 %v468
    %1729 = vmatpush1.msra.mxu0 %v467
    %1730 = vmatprep.subr.mxu0 %v472
    %1731 = vmatpush1.msra.mxu0 %v471
    %1732 = vmatprep.subr.mxu0 0.0
    %1733 = vmatpush1.msra.mxu0 0.0
    %1734 = vmatprep.subr.mxu0 0.0
    %1735 = vmatpush1.msra.mxu0 0.0
    %1736 = vmatprep.subr.mxu0 0.0
    %1737 = vmatpush1.msra.mxu0 0.0
    %1738 = vmatprep.subr.mxu0 0.0
    %1739 = vmatpush1.msra.mxu0 0.0
    %1740 = vmatprep.subr.mxu0 0.0
    %1741 = vmatpush1.msra.mxu0 0.0
    %1742 = vmatprep.subr.mxu0 0.0
    %1743 = vmatpush1.msra.mxu0 0.0
    %1744 = vmatprep.subr.mxu0 0.0
    %1745 = vmatpush1.msra.mxu0 0.0
    %1746 = vmatprep.subr.mxu0 0.0
    %1747 = vmatpush1.msra.mxu0 0.0
    %1748 = vmatprep.subr.mxu0 0.0
    %1749 = vmatpush1.msra.mxu0 0.0
    %1750 = vmatprep.subr.mxu0 0.0
    %1751 = vmatpush1.msra.mxu0 0.0
    %1752 = vmatprep.subr.mxu0 0.0
    %1753 = vmatpush1.msra.mxu0 0.0
    %1754 = vmatprep.subr.mxu0 0.0
    %1755 = vmatpush1.msra.mxu0 0.0
    %1756 = vmatprep.subr.mxu0 0.0
    %1757 = vmatpush1.msra.mxu0 0.0
    %1758 = vmatprep.subr.mxu0 0.0
    %1759 = vmatpush1.msra.mxu0 0.0
    %1760 = vmatprep.subr.mxu0 0.0
    %1761 = vmatpush1.msra.mxu0 0.0
    %1762 = vmatprep.subr.mxu0 0.0
    %1763 = vmatpush1.msra.mxu0 0.0
    %1764 = vmatprep.mubr.f32.mxu0 0.0
    %1765 = vmatmul.mubr.f32.gmra.mrb[0].mxu0 %v1694
    %v1766 = vpop.f32.mrb[0].mxu0
    %v1767 = vadd.f32 0.0, %v1766
    %v1768 = vpop.f32.mrb[0].mxu0
    %v1769 = vadd.f32 0.0, %v1768
    %1770 = vdwg.mxu0
    %1771 = vmatprep.subr.mxu0 %v414
    %1772 = vmatpush1.msra.mxu0 %v413
    %1773 = vmatprep.subr.mxu0 %v418
    %1774 = vmatpush1.msra.mxu0 %v417
    %1775 = vmatprep.subr.mxu0 %v422
    %1776 = vmatpush1.msra.mxu0 %v421
    %1777 = vmatprep.subr.mxu0 %v426
    %1778 = vmatpush1.msra.mxu0 %v425
    %1779 = vmatprep.subr.mxu0 %v430
    %1780 = vmatpush1.msra.mxu0 %v429
    %1781 = vmatprep.subr.mxu0 %v434
    %1782 = vmatpush1.msra.mxu0 %v433
    %1783 = vmatprep.subr.mxu0 %v438
    %1784 = vmatpush1.msra.mxu0 %v437
    %1785 = vmatprep.subr.mxu0 %v442
    %1786 = vmatpush1.msra.mxu0 %v441
    %1787 = vmatprep.subr.mxu0 %v446
    %1788 = vmatpush1.msra.mxu0 %v445
    %1789 = vmatprep.subr.mxu0 %v450
    %1790 = vmatpush1.msra.mxu0 %v449
    %1791 = vmatprep.subr.mxu0 %v454
    %1792 = vmatpush1.msra.mxu0 %v453
    %1793 = vmatprep.subr.mxu0 %v458
    %1794 = vmatpush1.msra.mxu0 %v457
    %1795 = vmatprep.subr.mxu0 %v462
    %1796 = vmatpush1.msra.mxu0 %v461
    %1797 = vmatprep.subr.mxu0 %v466
    %1798 = vmatpush1.msra.mxu0 %v465
    %1799 = vmatprep.subr.mxu0 %v470
    %1800 = vmatpush1.msra.mxu0 %v469
    %1801 = vmatprep.subr.mxu0 %v474
    %1802 = vmatpush1.msra.mxu0 %v473
    %1803 = vmatprep.subr.mxu0 0.0
    %1804 = vmatpush1.msra.mxu0 0.0
    %1805 = vmatprep.subr.mxu0 0.0
    %1806 = vmatpush1.msra.mxu0 0.0
    %1807 = vmatprep.subr.mxu0 0.0
    %1808 = vmatpush1.msra.mxu0 0.0
    %1809 = vmatprep.subr.mxu0 0.0
    %1810 = vmatpush1.msra.mxu0 0.0
    %1811 = vmatprep.subr.mxu0 0.0
    %1812 = vmatpush1.msra.mxu0 0.0
    %1813 = vmatprep.subr.mxu0 0.0
    %1814 = vmatpush1.msra.mxu0 0.0
    %1815 = vmatprep.subr.mxu0 0.0
    %1816 = vmatpush1.msra.mxu0 0.0
    %1817 = vmatprep.subr.mxu0 0.0
    %1818 = vmatpush1.msra.mxu0 0.0
    %1819 = vmatprep.subr.mxu0 0.0
    %1820 = vmatpush1.msra.mxu0 0.0
    %1821 = vmatprep.subr.mxu0 0.0
    %1822 = vmatpush1.msra.mxu0 0.0
    %1823 = vmatprep.subr.mxu0 0.0
    %1824 = vmatpush1.msra.mxu0 0.0
    %1825 = vmatprep.subr.mxu0 0.0
    %1826 = vmatpush1.msra.mxu0 0.0
    %1827 = vmatprep.subr.mxu0 0.0
    %1828 = vmatpush1.msra.mxu0 0.0
    %1829 = vmatprep.subr.mxu0 0.0
    %1830 = vmatpush1.msra.mxu0 0.0
    %1831 = vmatprep.subr.mxu0 0.0
    %1832 = vmatpush1.msra.mxu0 0.0
    %1833 = vmatprep.subr.mxu0 0.0
    %1834 = vmatpush1.msra.mxu0 0.0
    %1835 = vmatprep.mubr.f32.mxu0 0.0
    %1836 = vmatmul.mubr.f32.gmra.mrb[0].mxu0 %v1694
    %v1837 = vpop.f32.mrb[0].mxu0
    %v1838 = vadd.f32 0.0, %v1837
    %v1839 = vpop.f32.mrb[0].mxu0
    %v1840 = vadd.f32 0.0, %v1839
    %1841 = vdwg.mxu0
    %v1842 = vadd.f32 %v1696, %v1767
    %v1843 = vadd.f32 %v1697, %v1769
    %v1844 = vadd.f32 %v1698, %v1838
    %v1845 = vadd.f32 %v1699, %v1840
    %v1846 = vxor.u32 %v1842, 2147483648
    %v1847 = vmul.f32 %v1846, 1.442695
    %v1848 = vpow.pop %v1847
    %v1849 = vadd.f32 %v1848, 1.0
    %v1850 = vrcp.pop %v1849
    %v1851 = vmul.f32 1.0, %v1850
    %v1852 = vxor.u32 %v1843, 2147483648
    %v1853 = vmul.f32 %v1852, 1.442695
    %v1854 = vpow.pop %v1853
    %v1855 = vadd.f32 %v1854, 1.0
    %v1856 = vrcp.pop %v1855
    %v1857 = vmul.f32 1.0, %v1856
    %v1858 = vtanh.pop %v1844
    %v1859 = vxor.u32 %v1845, 2147483648
    %v1860 = vmul.f32 %v1859, 1.442695
    %v1861 = vpow.pop %v1860
    %v1862 = vadd.f32 %v1861, 1.0
    %v1863 = vrcp.pop %v1862
    %v1864 = vmul.f32 1.0, %v1863
    %v1865 = vmul.f32 %v1857, %v1692
    %v1866 = vmul.f32 %v1851, %v1858
    %v1867 = vadd.f32 %v1865, %v1866
    %v1868 = vtanh.pop %v1867
    %v1869 = vmul.f32 %v1864, %v1868
    %v1870 = vld [vmem:[#allocation8] sm:$0xff]
    %v1871 = vld [vmem:[#allocation8 + $0x8] sm:$0xff]
    %v1872 = vld [vmem:[#allocation8 + $0x10] sm:$0xff]
    %v1873 = vld [vmem:[#allocation8 + $0x18] sm:$0xff]
    %v1874 = vld [vmem:[#allocation8 + $0x20] sm:$0xff]
    %v1875 = vld [vmem:[#allocation8 + $0x28] sm:$0xff]
    %v1876 = vld [vmem:[#allocation8 + $0x30] sm:$0xff]
    %v1877 = vld [vmem:[#allocation8 + $0x38] sm:$0xff]
    %v1878 = vld [vmem:[#allocation8 + $0x40] sm:$0xff]
    %v1879 = vld [vmem:[#allocation8 + $0x48] sm:$0xff]
    %v1880 = vld [vmem:[#allocation8 + $0x50] sm:$0xff]
    %v1881 = vld [vmem:[#allocation8 + $0x58] sm:$0xff]
    %v1882 = vld [vmem:[#allocation8 + $0x60] sm:$0xff]
    %v1883 = vld [vmem:[#allocation8 + $0x68] sm:$0xff]
    %v1884 = vld [vmem:[#allocation8 + $0x70] sm:$0xff]
    %v1885 = vld [vmem:[#allocation8 + $0x78] sm:$0xff]
    %v1886 = vld [vmem:[%s5] sm:$0x1]
    %v1888 = vlaneseq
    %v1889 = vshrl.u32 %v1888, 7
    %v1890 = vsub.s32 0, %v1889
    %v1891 = vrot.slane %v1886, %v1890
    %1893 = vmatprep.subr.mxu0 0.0
    %1894 = vmatpush1.msra.mxu0 %v1870
    %1895 = vmatprep.subr.mxu0 0.0
    %1896 = vmatpush1.msra.mxu0 %v1871
    %1897 = vmatprep.subr.mxu0 0.0
    %1898 = vmatpush1.msra.mxu0 %v1872
    %1899 = vmatprep.subr.mxu0 0.0
    %1900 = vmatpush1.msra.mxu0 %v1873
    %1901 = vmatprep.subr.mxu0 0.0
    %1902 = vmatpush1.msra.mxu0 %v1874
    %1903 = vmatprep.subr.mxu0 0.0
    %1904 = vmatpush1.msra.mxu0 %v1875
    %1905 = vmatprep.subr.mxu0 0.0
    %1906 = vmatpush1.msra.mxu0 %v1876
    %1907 = vmatprep.subr.mxu0 0.0
    %1908 = vmatpush1.msra.mxu0 %v1877
    %1909 = vmatprep.subr.mxu0 0.0
    %1910 = vmatpush1.msra.mxu0 %v1878
    %1911 = vmatprep.subr.mxu0 0.0
    %1912 = vmatpush1.msra.mxu0 %v1879
    %1913 = vmatprep.subr.mxu0 0.0
    %1914 = vmatpush1.msra.mxu0 %v1880
    %1915 = vmatprep.subr.mxu0 0.0
    %1916 = vmatpush1.msra.mxu0 %v1881
    %1917 = vmatprep.subr.mxu0 0.0
    %1918 = vmatpush1.msra.mxu0 %v1882
    %1919 = vmatprep.subr.mxu0 0.0
    %1920 = vmatpush1.msra.mxu0 %v1883
    %1921 = vmatprep.subr.mxu0 0.0
    %1922 = vmatpush1.msra.mxu0 %v1884
    %1923 = vmatprep.subr.mxu0 0.0
    %1924 = vmatpush1.msra.mxu0 %v1885
    %1925 = vmatprep.subr.mxu0 0.0
    %1926 = vmatpush1.msra.mxu0 0.0
    %1927 = vmatprep.subr.mxu0 0.0
    %1928 = vmatpush1.msra.mxu0 0.0
    %1929 = vmatprep.subr.mxu0 0.0
    %1930 = vmatpush1.msra.mxu0 0.0
    %1931 = vmatprep.subr.mxu0 0.0
    %1932 = vmatpush1.msra.mxu0 0.0
    %1933 = vmatprep.subr.mxu0 0.0
    %1934 = vmatpush1.msra.mxu0 0.0
    %1935 = vmatprep.subr.mxu0 0.0
    %1936 = vmatpush1.msra.mxu0 0.0
    %1937 = vmatprep.subr.mxu0 0.0
    %1938 = vmatpush1.msra.mxu0 0.0
    %1939 = vmatprep.subr.mxu0 0.0
    %1940 = vmatpush1.msra.mxu0 0.0
    %1941 = vmatprep.subr.mxu0 0.0
    %1942 = vmatpush1.msra.mxu0 0.0
    %1943 = vmatprep.subr.mxu0 0.0
    %1944 = vmatpush1.msra.mxu0 0.0
    %1945 = vmatprep.subr.mxu0 0.0
    %1946 = vmatpush1.msra.mxu0 0.0
    %1947 = vmatprep.subr.mxu0 0.0
    %1948 = vmatpush1.msra.mxu0 0.0
    %1949 = vmatprep.subr.mxu0 0.0
    %1950 = vmatpush1.msra.mxu0 0.0
    %1951 = vmatprep.subr.mxu0 0.0
    %1952 = vmatpush1.msra.mxu0 0.0
    %1953 = vmatprep.subr.mxu0 0.0
    %1954 = vmatpush1.msra.mxu0 0.0
    %1955 = vmatprep.subr.mxu0 0.0
    %1956 = vmatpush1.msra.mxu0 0.0
    %1957 = vmatprep.mubr.f32.mxu0 0.0
    %1958 = vmatmul.mubr.f32.gmra.mrb[0].mxu0 %v1869
    %v1959 = vpop.f32.mrb[0].mxu0
    %v1960 = vadd.f32 %v1891, %v1959
    %v1961 = vpop.f32.mrb[0].mxu0
    %1962 = vdwg.mxu0
    %1963 = vst [vmem:[#allocation9] sm:$0xff] %v1960
    // Predicated region
    $region38: #{tpu_custom_call.1} parent=1 // pred_check
      _
    $region39: #{tpu_custom_call.1} parent=1 // pred_check_branch
      %1965 = sbr.rel (0) target = $region41
    $region40: #{tpu_custom_call.1} parent=1 // pred_region
      %s1967 = ssub.s32 128, 128
      %1968 = vsyncadd [#allocation5], %s1967
      %s1970 = sshll.u32 [#allocation9], 4
      %s1971 = int_to_ptr.vmem [resolvable:$true] %s1970
      %1973 = dma.vmem_to_hbm [thread:$0]  %s1971, 128, %s6, [#allocation5]
    $region41: #{tpu_custom_call.1} parent=1 // pred_fallthru
      _
    // Predicated region
    $region42: #{tpu_custom_call.1} parent=1 // pred_check
      _
    $region43: #{tpu_custom_call.1} parent=1 // pred_check_branch
      %1975 = sbr.rel (0) target = $region45
    $region44: #{tpu_custom_call.1} parent=1 // pred_region
      %1976 = dma.done [#allocation5], 128
    $region45: #{tpu_custom_call.1} parent=1 // pred_fallthru
      _
    %1977 = vsyncpa [#allocation4], 1
    %1978 = vsyncpa [#allocation7], 1
    %1979 = vsyncpa [#allocation5], 1

</llo_original>
